<compile_context>
chip_gen: v5e
topology: v5e:2x2
jax: 0.10.0
libtpu: 0.0.40
codegen_flags: <defaults>
</compile_context>

<pallas_src>
import functools

import jax
import jax.numpy as jnp
from jax.experimental import pallas as pl
from jax.experimental.pallas import tpu as pltpu


_W = 896  # 7 emotion columns interleaved across 128 lane groups (7 * 128)


def _moments_kernel(shift_ref, yp_ref, yt_ref, out_ref, *, total_rows):
    """Accumulate shifted raw moments of one core's slice of the (R, 896) view.

    shift_ref: (2, 896) per-lane column shifts (row 0: pred, row 1: true).
    yp_ref / yt_ref: (TR, 896) tile of the flattened inputs.
    out_ref: (5, 8, 896) f32 lane/sublane-partial moments for this core
             (sum p, sum t, sum p*p, sum t*t, sum p*t), resident across steps.
    """
    core = pl.program_id(0)
    step = pl.program_id(1)
    steps = pl.num_programs(1)
    tr, w = yp_ref.shape

    @pl.when(step == 0)
    def _init():
        out_ref[...] = jnp.zeros_like(out_ref)

    # Global (unclamped) tile index and number of in-bounds rows in this tile.
    blk = core * steps + step
    valid = total_rows - blk * tr           # >= tr: full tile, <= 0: idle tile

    p0 = yp_ref[...].astype(jnp.float32) - shift_ref[0:1, :]
    t0 = yt_ref[...].astype(jnp.float32) - shift_ref[1:2, :]

    def accumulate(p, t):
        def fold(x):  # sublane-block fold: pure VPU vreg adds, no XLU
            return jnp.sum(x.reshape(tr // 8, 8, w), axis=0)
        out_ref[0, :, :] += fold(p)
        out_ref[1, :, :] += fold(t)
        out_ref[2, :, :] += fold(p * p)
        out_ref[3, :, :] += fold(t * t)
        out_ref[4, :, :] += fold(p * t)

    @pl.when(valid >= tr)                   # common case: full tile, no mask
    def _full():
        accumulate(p0, t0)

    @pl.when(valid < tr)                    # partial last tile / idle clamped tile
    def _partial():
        row = jax.lax.broadcasted_iota(jnp.int32, (tr, w), 0)
        keep = row < valid
        accumulate(jnp.where(keep, p0, 0.0), jnp.where(keep, t0, 0.0))


def single_ccc_loss(y_pred, y_true, *, rows_per_step=1024, num_cores=2):
    """Mean over the 7 columns of (1 - CCC(y_pred[:, i], y_true[:, i]))."""
    assert y_pred.shape == y_true.shape, "y_pred / y_true shapes must match"
    n_samples, n_cols = y_pred.shape
    assert n_cols == 7, "Single_CCCLoss expects 7 emotion columns"
    assert n_samples >= 2, "unbiased variance (torch.var) needs at least 2 rows"

    # Per-column shift (from the first <=128 rows) stabilizes the one-pass moments.
    nh = min(n_samples, 128)
    kp = jnp.mean(y_pred[:nh].astype(jnp.float32), axis=0)     # (7,)
    kt = jnp.mean(y_true[:nh].astype(jnp.float32), axis=0)     # (7,)

    rows = n_samples // 128            # rows of the (rows, 896) lane-dense view
    use_kernel = rows >= 8             # small-B fast path: XLA beats a launch
    n_main = rows * 128 if use_kernel else 0

    # Shifted sums: sum p, sum t, sum p*p, sum t*t, sum p*t  (per column)
    moments = jnp.zeros((5, 7), jnp.float32)

    if use_kernel:
        # Zero-copy bitcast view when B is a multiple of 128; otherwise the
        # prefix slice may cost one extra copy of the main part (tail < 128
        # rows is handled in plain JAX below).
        main_p = y_pred if n_main == n_samples else y_pred[:n_main]
        main_t = y_true if n_main == n_samples else y_true[:n_main]
        yp2d = main_p.reshape(rows, _W)
        yt2d = main_t.reshape(rows, _W)
        # lane k of the shift row holds the shift of column (k % 7).
        lane_shift = jnp.stack([jnp.tile(kp, 128), jnp.tile(kt, 128)], axis=0)

        tr = max(8, (min(rows_per_step, rows) // 8) * 8)
        nblocks = -(-rows // tr)
        steps = -(-nblocks // num_cores)

        def data_map(c, i):
            # Clamp so idle trailing steps re-fetch the last tile; the kernel
            # masks them to zero via `valid`.
            return (jnp.minimum(c * steps + i, nblocks - 1), 0)

        partial = pl.pallas_call(
            functools.partial(_moments_kernel, total_rows=rows),
            out_shape=jax.ShapeDtypeStruct((num_cores * 5, 8, _W), jnp.float32),
            grid_spec=pltpu.PrefetchScalarGridSpec(
                num_scalar_prefetch=0,
                grid=(num_cores, steps),
                in_specs=[
                    pl.BlockSpec((2, _W), lambda c, i: (0, 0)),
                    pl.BlockSpec((tr, _W), data_map),
                    pl.BlockSpec((tr, _W), data_map),
                ],
                out_specs=pl.BlockSpec((5, 8, _W), lambda c, i: (c, 0, 0)),
            ),
            compiler_params=pltpu.CompilerParams(
                dimension_semantics=("parallel", "arbitrary"),
                vmem_limit_bytes=32 * 1024 * 1024,
            ),
        )(lane_shift, yp2d, yt2d)

        # Fold cores + sublane partials -> (5, 896); lane k holds column k % 7.
        part = partial.reshape(num_cores, 5, 8, _W).sum(axis=(0, 2))
        moments = part.reshape(5, 128, 7).sum(axis=1)

    if n_main < n_samples:  # < 128-row tail (or everything, on the small-B path)
        tp = y_pred[n_main:].astype(jnp.float32) - kp[None, :]
        tt = y_true[n_main:].astype(jnp.float32) - kt[None, :]
        moments = moments + jnp.stack(
            [tp.sum(0), tt.sum(0), (tp * tp).sum(0), (tt * tt).sum(0),
             (tp * tt).sum(0)], axis=0)

    # CCC finalize over 7 scalars -- exactly the PyTorch algebra.
    s1p, s1t, s2p, s2t, s11 = moments
    n = float(n_samples)                              # exact for B < 2**24
    mean_p = kp + s1p / n
    mean_t = kt + s1t / n
    var_p = (s2p - s1p * s1p / n) / (n - 1.0)         # torch.var: unbiased
    var_t = (s2t - s1t * s1t / n) / (n - 1.0)
    cov = (s11 - s1p * s1t / n) / n                   # biased mean, as in module
    ccc = 2.0 * cov / (var_p + var_t + (mean_p - mean_t) ** 2)
    return jnp.mean(1.0 - ccc)


def _reference_ccc_loss(y_pred, y_true):
    """Pure-JAX mirror of the PyTorch module (column-by-column, two-pass)."""
    n = y_pred.shape[0]
    total = jnp.float32(0.0)
    for i in range(7):
        p = y_pred[:, i].astype(jnp.float32)
        t = y_true[:, i].astype(jnp.float32)
        mp = jnp.mean(p)
        mt = jnp.mean(t)
        vp = jnp.sum((p - mp) ** 2) / (n - 1)
        vt = jnp.sum((t - mt) ** 2) / (n - 1)
        cov = jnp.mean((p - mp) * (t - mt))
        ccc = 2.0 * cov / (vp + vt + (mp - mt) ** 2)
        total = total + (1.0 - ccc)
    return total / 7.0


if __name__ == "__main__":
    key = jax.random.PRNGKey(0)
    k1, k2, k3, k4 = jax.random.split(key, 4)

    def make_inputs(ka, kb, batch):
        base = jax.random.normal(ka, (batch, 7), jnp.float32)
        noise = jax.random.normal(kb, (batch, 7), jnp.float32)
        y_pred = 1.5 + 0.8 * base
        y_true = 1.2 + 0.6 * base + 0.4 * noise      # correlated with y_pred
        return y_pred, y_true

    # 1) Kernel path: batch a multiple of 128 (zero-copy view), default tiling.
    yp1, yt1 = make_inputs(k1, k2, 4096)
    loss1 = jax.jit(single_ccc_loss)(yp1, yt1)
    jax.block_until_ready(loss1)
    ref1 = _reference_ccc_loss(yp1, yt1)
    assert jnp.allclose(loss1, ref1, rtol=1e-4, atol=1e-4), (loss1, ref1)

    # 2) Kernel path with multi-step accumulation, a partial last tile, an idle
    #    (clamped) megacore step and a <128-row JAX tail.
    yp2, yt2 = make_inputs(k3, k4, 4243)
    loss2 = jax.jit(functools.partial(single_ccc_loss, rows_per_step=8))(yp2, yt2)
    jax.block_until_ready(loss2)
    ref2 = _reference_ccc_loss(yp2, yt2)
    assert jnp.allclose(loss2, ref2, rtol=1e-4, atol=1e-4), (loss2, ref2)

    # 3) Small-batch fast path (pure JAX, no kernel launch).
    yp3, yt3 = make_inputs(k1, k4, 300)
    loss3 = jax.jit(single_ccc_loss)(yp3, yt3)
    jax.block_until_ready(loss3)
    ref3 = _reference_ccc_loss(yp3, yt3)
    assert jnp.allclose(loss3, ref3, rtol=1e-4, atol=1e-4), (loss3, ref3)

    print("KERNEL_OK")
</pallas_src>

<mosaic_0001>
module attributes {stable_mosaic.version = 11 : i64} {
  func.func @_moments_kernel(%arg0: i32, %arg1: i32, %arg2: memref<2x896xf32, #tpu.memory_space<vmem>>, %arg3: memref<32x896xf32, #tpu.memory_space<vmem>>, %arg4: memref<32x896xf32, #tpu.memory_space<vmem>>, %arg5: memref<5x8x896xf32, #tpu.memory_space<vmem>>) attributes {dimension_semantics = [#tpu.dimension_semantics<parallel>, #tpu.dimension_semantics<arbitrary>], iteration_bounds = array<i64: 2, 1>, scalar_prefetch = 0 : i64, scratch_operands = 0 : i64, tpu.core_type = #tpu.core_type<tc>, window_params = [{pipeline_mode = #tpu.pipeline_mode<synchronous>, transform_indices = @transform_0, window_bounds = array<i64: 2, 896>}, {transform_indices = @transform_1, window_bounds = array<i64: 32, 896>}, {transform_indices = @transform_2, window_bounds = array<i64: 32, 896>}, {transform_indices = @transform_3, window_bounds = array<i64: 5, 8, 896>}]} {
    %c0_i32 = arith.constant 0 : i32
    %0 = arith.cmpi eq, %arg1, %c0_i32 : i32
    %1 = arith.extui %0 : i1 to i32
    %c0_i32_0 = arith.constant 0 : i32
    %2 = arith.cmpi ne, %1, %c0_i32_0 : i32
    scf.if %2 {
      %cst = arith.constant 0.000000e+00 : f32
      %21 = vector.broadcast %cst : f32 to vector<5x8x896xf32>
      %c0_12 = arith.constant 0 : index
      %c0_13 = arith.constant 0 : index
      %c0_14 = arith.constant 0 : index
      %22 = vector.load %arg5[%c0_12, %c0_13, %c0_14] : memref<5x8x896xf32, #tpu.memory_space<vmem>>, vector<5x8x896xf32>
      tpu.vector_store %arg5[%c0_12, %c0_13, %c0_14], %21 {strides = array<i32>} : memref<5x8x896xf32, #tpu.memory_space<vmem>>, vector<5x8x896xf32>,
    } else {
    }
    %c1_i32 = arith.constant 1 : i32
    %3 = arith.muli %arg0, %c1_i32 : i32
    %4 = arith.addi %3, %arg1 : i32
    %c32_i32 = arith.constant 32 : i32
    %5 = arith.muli %4, %c32_i32 : i32
    %c32_i32_1 = arith.constant 32 : i32
    %6 = arith.subi %c32_i32_1, %5 : i32
    %c0 = arith.constant 0 : index
    %c0_2 = arith.constant 0 : index
    %7 = vector.load %arg3[%c0, %c0_2] : memref<32x896xf32, #tpu.memory_space<vmem>>, vector<32x896xf32>
    %c0_3 = arith.constant 0 : index
    %c0_4 = arith.constant 0 : index
    %8 = vector.load %arg2[%c0_3, %c0_4] : memref<2x896xf32, #tpu.memory_space<vmem>>, vector<1x896xf32>
    %9 = vector.broadcast %8 : vector<1x896xf32> to vector<32x896xf32>
    %10 = arith.subf %7, %9 : vector<32x896xf32>
    %c0_5 = arith.constant 0 : index
    %c0_6 = arith.constant 0 : index
    %11 = vector.load %arg4[%c0_5, %c0_6] : memref<32x896xf32, #tpu.memory_space<vmem>>, vector<32x896xf32>
    %c1 = arith.constant 1 : index
    %c0_7 = arith.constant 0 : index
    %12 = vector.load %arg2[%c1, %c0_7] : memref<2x896xf32, #tpu.memory_space<vmem>>, vector<1x896xf32>
    %13 = vector.broadcast %12 : vector<1x896xf32> to vector<32x896xf32>
    %14 = arith.subf %11, %13 : vector<32x896xf32>
    %c32_i32_8 = arith.constant 32 : i32
    %15 = arith.cmpi sge, %6, %c32_i32_8 : i32
    %16 = arith.extui %15 : i1 to i32
    %c0_i32_9 = arith.constant 0 : i32
    %17 = arith.cmpi ne, %16, %c0_i32_9 : i32
    scf.if %17 {
      %c0_12 = arith.constant 0 : index
      %c0_13 = arith.constant 0 : index
      %c0_14 = arith.constant 0 : index
      %21 = vector.load %arg5[%c0_12, %c0_13, %c0_14] : memref<5x8x896xf32, #tpu.memory_space<vmem>>, vector<1x8x896xf32>
      %22 = vector.shape_cast %21 : vector<1x8x896xf32> to vector<8x896xf32>
      %23 = vector.shape_cast %10 : vector<32x896xf32> to vector<4x8x896xf32>
      %cst = arith.constant dense<0.000000e+00> : vector<8x896xf32>
      %24 = vector.multi_reduction <add>, %23, %cst [0] : vector<4x8x896xf32> to vector<8x896xf32>
      %25 = arith.addf %22, %24 : vector<8x896xf32>
      %c0_15 = arith.constant 0 : index
      %c0_16 = arith.constant 0 : index
      %c0_17 = arith.constant 0 : index
      %26 = vector.load %arg5[%c0_15, %c0_16, %c0_17] : memref<5x8x896xf32, #tpu.memory_space<vmem>>, vector<1x8x896xf32>
      %27 = vector.shape_cast %26 : vector<1x8x896xf32> to vector<8x896xf32>
      %28 = vector.shape_cast %25 : vector<8x896xf32> to vector<1x8x896xf32>
      tpu.vector_store %arg5[%c0_15, %c0_16, %c0_17], %28 {strides = array<i32>} : memref<5x8x896xf32, #tpu.memory_space<vmem>>, vector<1x8x896xf32>,
      %c1_18 = arith.constant 1 : index
      %c0_19 = arith.constant 0 : index
      %c0_20 = arith.constant 0 : index
      %29 = vector.load %arg5[%c1_18, %c0_19, %c0_20] : memref<5x8x896xf32, #tpu.memory_space<vmem>>, vector<1x8x896xf32>
      %30 = vector.shape_cast %29 : vector<1x8x896xf32> to vector<8x896xf32>
      %31 = vector.shape_cast %14 : vector<32x896xf32> to vector<4x8x896xf32>
      %cst_21 = arith.constant dense<0.000000e+00> : vector<8x896xf32>
      %32 = vector.multi_reduction <add>, %31, %cst_21 [0] : vector<4x8x896xf32> to vector<8x896xf32>
      %33 = arith.addf %30, %32 : vector<8x896xf32>
      %c1_22 = arith.constant 1 : index
      %c0_23 = arith.constant 0 : index
      %c0_24 = arith.constant 0 : index
      %34 = vector.load %arg5[%c1_22, %c0_23, %c0_24] : memref<5x8x896xf32, #tpu.memory_space<vmem>>, vector<1x8x896xf32>
      %35 = vector.shape_cast %34 : vector<1x8x896xf32> to vector<8x896xf32>
      %36 = vector.shape_cast %33 : vector<8x896xf32> to vector<1x8x896xf32>
      tpu.vector_store %arg5[%c1_22, %c0_23, %c0_24], %36 {strides = array<i32>} : memref<5x8x896xf32, #tpu.memory_space<vmem>>, vector<1x8x896xf32>,
      %c2 = arith.constant 2 : index
      %c0_25 = arith.constant 0 : index
      %c0_26 = arith.constant 0 : index
      %37 = vector.load %arg5[%c2, %c0_25, %c0_26] : memref<5x8x896xf32, #tpu.memory_space<vmem>>, vector<1x8x896xf32>
      %38 = vector.shape_cast %37 : vector<1x8x896xf32> to vector<8x896xf32>
      %39 = arith.mulf %10, %10 : vector<32x896xf32>
      %40 = vector.shape_cast %39 : vector<32x896xf32> to vector<4x8x896xf32>
      %cst_27 = arith.constant dense<0.000000e+00> : vector<8x896xf32>
      %41 = vector.multi_reduction <add>, %40, %cst_27 [0] : vector<4x8x896xf32> to vector<8x896xf32>
      %42 = arith.addf %38, %41 : vector<8x896xf32>
      %c2_28 = arith.constant 2 : index
      %c0_29 = arith.constant 0 : index
      %c0_30 = arith.constant 0 : index
      %43 = vector.load %arg5[%c2_28, %c0_29, %c0_30] : memref<5x8x896xf32, #tpu.memory_space<vmem>>, vector<1x8x896xf32>
      %44 = vector.shape_cast %43 : vector<1x8x896xf32> to vector<8x896xf32>
      %45 = vector.shape_cast %42 : vector<8x896xf32> to vector<1x8x896xf32>
      tpu.vector_store %arg5[%c2_28, %c0_29, %c0_30], %45 {strides = array<i32>} : memref<5x8x896xf32, #tpu.memory_space<vmem>>, vector<1x8x896xf32>,
      %c3 = arith.constant 3 : index
      %c0_31 = arith.constant 0 : index
      %c0_32 = arith.constant 0 : index
      %46 = vector.load %arg5[%c3, %c0_31, %c0_32] : memref<5x8x896xf32, #tpu.memory_space<vmem>>, vector<1x8x896xf32>
      %47 = vector.shape_cast %46 : vector<1x8x896xf32> to vector<8x896xf32>
      %48 = arith.mulf %14, %14 : vector<32x896xf32>
      %49 = vector.shape_cast %48 : vector<32x896xf32> to vector<4x8x896xf32>
      %cst_33 = arith.constant dense<0.000000e+00> : vector<8x896xf32>
      %50 = vector.multi_reduction <add>, %49, %cst_33 [0] : vector<4x8x896xf32> to vector<8x896xf32>
      %51 = arith.addf %47, %50 : vector<8x896xf32>
      %c3_34 = arith.constant 3 : index
      %c0_35 = arith.constant 0 : index
      %c0_36 = arith.constant 0 : index
      %52 = vector.load %arg5[%c3_34, %c0_35, %c0_36] : memref<5x8x896xf32, #tpu.memory_space<vmem>>, vector<1x8x896xf32>
      %53 = vector.shape_cast %52 : vector<1x8x896xf32> to vector<8x896xf32>
      %54 = vector.shape_cast %51 : vector<8x896xf32> to vector<1x8x896xf32>
      tpu.vector_store %arg5[%c3_34, %c0_35, %c0_36], %54 {strides = array<i32>} : memref<5x8x896xf32, #tpu.memory_space<vmem>>, vector<1x8x896xf32>,
      %c4 = arith.constant 4 : index
      %c0_37 = arith.constant 0 : index
      %c0_38 = arith.constant 0 : index
      %55 = vector.load %arg5[%c4, %c0_37, %c0_38] : memref<5x8x896xf32, #tpu.memory_space<vmem>>, vector<1x8x896xf32>
      %56 = vector.shape_cast %55 : vector<1x8x896xf32> to vector<8x896xf32>
      %57 = arith.mulf %10, %14 : vector<32x896xf32>
      %58 = vector.shape_cast %57 : vector<32x896xf32> to vector<4x8x896xf32>
      %cst_39 = arith.constant dense<0.000000e+00> : vector<8x896xf32>
      %59 = vector.multi_reduction <add>, %58, %cst_39 [0] : vector<4x8x896xf32> to vector<8x896xf32>
      %60 = arith.addf %56, %59 : vector<8x896xf32>
      %c4_40 = arith.constant 4 : index
      %c0_41 = arith.constant 0 : index
      %c0_42 = arith.constant 0 : index
      %61 = vector.load %arg5[%c4_40, %c0_41, %c0_42] : memref<5x8x896xf32, #tpu.memory_space<vmem>>, vector<1x8x896xf32>
      %62 = vector.shape_cast %61 : vector<1x8x896xf32> to vector<8x896xf32>
      %63 = vector.shape_cast %60 : vector<8x896xf32> to vector<1x8x896xf32>
      tpu.vector_store %arg5[%c4_40, %c0_41, %c0_42], %63 {strides = array<i32>} : memref<5x8x896xf32, #tpu.memory_space<vmem>>, vector<1x8x896xf32>,
    } else {
    }
    %c32_i32_10 = arith.constant 32 : i32
    %18 = arith.cmpi slt, %6, %c32_i32_10 : i32
    %19 = arith.extui %18 : i1 to i32
    %c0_i32_11 = arith.constant 0 : i32
    %20 = arith.cmpi ne, %19, %c0_i32_11 : i32
    scf.if %20 {
      %21 = tpu.iota {dimensions = array<i32: 0>} : vector<32x896xi32>
      %22 = vector.broadcast %6 : i32 to vector<32x896xi32>
      %23 = arith.cmpi slt, %21, %22 : vector<32x896xi32>
      %cst = arith.constant 0.000000e+00 : f32
      %24 = vector.broadcast %cst : f32 to vector<32x896xf32>
      %25 = arith.select %23, %10, %24 : vector<32x896xi1>, vector<32x896xf32>
      %cst_12 = arith.constant 0.000000e+00 : f32
      %26 = vector.broadcast %cst_12 : f32 to vector<32x896xf32>
      %27 = arith.select %23, %14, %26 : vector<32x896xi1>, vector<32x896xf32>
      %c0_13 = arith.constant 0 : index
      %c0_14 = arith.constant 0 : index
      %c0_15 = arith.constant 0 : index
      %28 = vector.load %arg5[%c0_13, %c0_14, %c0_15] : memref<5x8x896xf32, #tpu.memory_space<vmem>>, vector<1x8x896xf32>
      %29 = vector.shape_cast %28 : vector<1x8x896xf32> to vector<8x896xf32>
      %30 = vector.shape_cast %25 : vector<32x896xf32> to vector<4x8x896xf32>
      %cst_16 = arith.constant dense<0.000000e+00> : vector<8x896xf32>
      %31 = vector.multi_reduction <add>, %30, %cst_16 [0] : vector<4x8x896xf32> to vector<8x896xf32>
      %32 = arith.addf %29, %31 : vector<8x896xf32>
      %c0_17 = arith.constant 0 : index
      %c0_18 = arith.constant 0 : index
      %c0_19 = arith.constant 0 : index
      %33 = vector.load %arg5[%c0_17, %c0_18, %c0_19] : memref<5x8x896xf32, #tpu.memory_space<vmem>>, vector<1x8x896xf32>
      %34 = vector.shape_cast %33 : vector<1x8x896xf32> to vector<8x896xf32>
      %35 = vector.shape_cast %32 : vector<8x896xf32> to vector<1x8x896xf32>
      tpu.vector_store %arg5[%c0_17, %c0_18, %c0_19], %35 {strides = array<i32>} : memref<5x8x896xf32, #tpu.memory_space<vmem>>, vector<1x8x896xf32>,
      %c1_20 = arith.constant 1 : index
      %c0_21 = arith.constant 0 : index
      %c0_22 = arith.constant 0 : index
      %36 = vector.load %arg5[%c1_20, %c0_21, %c0_22] : memref<5x8x896xf32, #tpu.memory_space<vmem>>, vector<1x8x896xf32>
      %37 = vector.shape_cast %36 : vector<1x8x896xf32> to vector<8x896xf32>
      %38 = vector.shape_cast %27 : vector<32x896xf32> to vector<4x8x896xf32>
      %cst_23 = arith.constant dense<0.000000e+00> : vector<8x896xf32>
      %39 = vector.multi_reduction <add>, %38, %cst_23 [0] : vector<4x8x896xf32> to vector<8x896xf32>
      %40 = arith.addf %37, %39 : vector<8x896xf32>
      %c1_24 = arith.constant 1 : index
      %c0_25 = arith.constant 0 : index
      %c0_26 = arith.constant 0 : index
      %41 = vector.load %arg5[%c1_24, %c0_25, %c0_26] : memref<5x8x896xf32, #tpu.memory_space<vmem>>, vector<1x8x896xf32>
      %42 = vector.shape_cast %41 : vector<1x8x896xf32> to vector<8x896xf32>
      %43 = vector.shape_cast %40 : vector<8x896xf32> to vector<1x8x896xf32>
      tpu.vector_store %arg5[%c1_24, %c0_25, %c0_26], %43 {strides = array<i32>} : memref<5x8x896xf32, #tpu.memory_space<vmem>>, vector<1x8x896xf32>,
      %c2 = arith.constant 2 : index
      %c0_27 = arith.constant 0 : index
      %c0_28 = arith.constant 0 : index
      %44 = vector.load %arg5[%c2, %c0_27, %c0_28] : memref<5x8x896xf32, #tpu.memory_space<vmem>>, vector<1x8x896xf32>
      %45 = vector.shape_cast %44 : vector<1x8x896xf32> to vector<8x896xf32>
      %46 = arith.mulf %25, %25 : vector<32x896xf32>
      %47 = vector.shape_cast %46 : vector<32x896xf32> to vector<4x8x896xf32>
      %cst_29 = arith.constant dense<0.000000e+00> : vector<8x896xf32>
      %48 = vector.multi_reduction <add>, %47, %cst_29 [0] : vector<4x8x896xf32> to vector<8x896xf32>
      %49 = arith.addf %45, %48 : vector<8x896xf32>
      %c2_30 = arith.constant 2 : index
      %c0_31 = arith.constant 0 : index
      %c0_32 = arith.constant 0 : index
      %50 = vector.load %arg5[%c2_30, %c0_31, %c0_32] : memref<5x8x896xf32, #tpu.memory_space<vmem>>, vector<1x8x896xf32>
      %51 = vector.shape_cast %50 : vector<1x8x896xf32> to vector<8x896xf32>
      %52 = vector.shape_cast %49 : vector<8x896xf32> to vector<1x8x896xf32>
      tpu.vector_store %arg5[%c2_30, %c0_31, %c0_32], %52 {strides = array<i32>} : memref<5x8x896xf32, #tpu.memory_space<vmem>>, vector<1x8x896xf32>,
      %c3 = arith.constant 3 : index
      %c0_33 = arith.constant 0 : index
      %c0_34 = arith.constant 0 : index
      %53 = vector.load %arg5[%c3, %c0_33, %c0_34] : memref<5x8x896xf32, #tpu.memory_space<vmem>>, vector<1x8x896xf32>
      %54 = vector.shape_cast %53 : vector<1x8x896xf32> to vector<8x896xf32>
      %55 = arith.mulf %27, %27 : vector<32x896xf32>
      %56 = vector.shape_cast %55 : vector<32x896xf32> to vector<4x8x896xf32>
      %cst_35 = arith.constant dense<0.000000e+00> : vector<8x896xf32>
      %57 = vector.multi_reduction <add>, %56, %cst_35 [0] : vector<4x8x896xf32> to vector<8x896xf32>
      %58 = arith.addf %54, %57 : vector<8x896xf32>
      %c3_36 = arith.constant 3 : index
      %c0_37 = arith.constant 0 : index
      %c0_38 = arith.constant 0 : index
      %59 = vector.load %arg5[%c3_36, %c0_37, %c0_38] : memref<5x8x896xf32, #tpu.memory_space<vmem>>, vector<1x8x896xf32>
      %60 = vector.shape_cast %59 : vector<1x8x896xf32> to vector<8x896xf32>
      %61 = vector.shape_cast %58 : vector<8x896xf32> to vector<1x8x896xf32>
      tpu.vector_store %arg5[%c3_36, %c0_37, %c0_38], %61 {strides = array<i32>} : memref<5x8x896xf32, #tpu.memory_space<vmem>>, vector<1x8x896xf32>,
      %c4 = arith.constant 4 : index
      %c0_39 = arith.constant 0 : index
      %c0_40 = arith.constant 0 : index
      %62 = vector.load %arg5[%c4, %c0_39, %c0_40] : memref<5x8x896xf32, #tpu.memory_space<vmem>>, vector<1x8x896xf32>
      %63 = vector.shape_cast %62 : vector<1x8x896xf32> to vector<8x896xf32>
      %64 = arith.mulf %25, %27 : vector<32x896xf32>
      %65 = vector.shape_cast %64 : vector<32x896xf32> to vector<4x8x896xf32>
      %cst_41 = arith.constant dense<0.000000e+00> : vector<8x896xf32>
      %66 = vector.multi_reduction <add>, %65, %cst_41 [0] : vector<4x8x896xf32> to vector<8x896xf32>
      %67 = arith.addf %63, %66 : vector<8x896xf32>
      %c4_42 = arith.constant 4 : index
      %c0_43 = arith.constant 0 : index
      %c0_44 = arith.constant 0 : index
      %68 = vector.load %arg5[%c4_42, %c0_43, %c0_44] : memref<5x8x896xf32, #tpu.memory_space<vmem>>, vector<1x8x896xf32>
      %69 = vector.shape_cast %68 : vector<1x8x896xf32> to vector<8x896xf32>
      %70 = vector.shape_cast %67 : vector<8x896xf32> to vector<1x8x896xf32>
      tpu.vector_store %arg5[%c4_42, %c0_43, %c0_44], %70 {strides = array<i32>} : memref<5x8x896xf32, #tpu.memory_space<vmem>>, vector<1x8x896xf32>,
    } else {
    }
    return
  }
  func.func @transform_0(%arg0: i32, %arg1: i32) -> (i32, i32) {
    %c0_i32 = arith.constant 0 : i32
    %c0_i32_0 = arith.constant 0 : i32
    %c0_i32_1 = arith.constant 0 : i32
    return %c0_i32, %c0_i32_0 : i32, i32
  }
  func.func @transform_1(%arg0: i32, %arg1: i32) -> (i32, i32) {
    %c1_i32 = arith.constant 1 : i32
    %0 = arith.muli %arg0, %c1_i32 : i32
    %1 = arith.addi %0, %arg1 : i32
    %c0_i32 = arith.constant 0 : i32
    %2 = arith.minsi %1, %c0_i32 : i32
    %c0_i32_0 = arith.constant 0 : i32
    %c0_i32_1 = arith.constant 0 : i32
    return %2, %c0_i32_0 : i32, i32
  }
  func.func @transform_2(%arg0: i32, %arg1: i32) -> (i32, i32) {
    %c1_i32 = arith.constant 1 : i32
    %0 = arith.muli %arg0, %c1_i32 : i32
    %1 = arith.addi %0, %arg1 : i32
    %c0_i32 = arith.constant 0 : i32
    %2 = arith.minsi %1, %c0_i32 : i32
    %c0_i32_0 = arith.constant 0 : i32
    %c0_i32_1 = arith.constant 0 : i32
    return %2, %c0_i32_0 : i32, i32
  }
  func.func @transform_3(%arg0: i32, %arg1: i32) -> (i32, i32, i32) {
    %c0_i32 = arith.constant 0 : i32
    %c0_i32_0 = arith.constant 0 : i32
    %c0_i32_1 = arith.constant 0 : i32
    return %arg0, %c0_i32, %c0_i32_0 : i32, i32, i32
  }
}

</mosaic_0001>

<llo_original>
// kernel: tile.13
$region0: #{tile.13}
  #allocation0 [shape = 's32[1]{0}', space=sflag, size = 0x4, scoped, tag = 'scoped memory for tile.13']
  %s0 = inlined_call_operand.vmem [shape: f32[7], index: 0, kind: input, shape index: {}]
  %s1 = inlined_call_operand.vmem [shape: f32[128,7], index: 1, kind: output, shape index: {}]
  // Predicated region
  $region2: #{tile.13} parent=0 // pred_check
    _
  $region3: #{tile.13} parent=0 // pred_check_branch
    %3 = sbr.rel (0) target = $region5
  $region4: #{tile.13} parent=0 // pred_region
    _
  $region5: #{tile.13} parent=0 // pred_fallthru
    _
  %v4 = vld [vmem:[%s0] ss:$0 sm:$0xff]
  %5 = vst [vmem:[%s1] sm:$0xff] %v4
  %s6 = scalar_lea.vmem %s1, 8
  %7 = vst [vmem:[%s6] sm:$0xff] %v4
  %s8 = scalar_lea.vmem %s1, 16
  %9 = vst [vmem:[%s8] sm:$0xff] %v4
  %s10 = scalar_lea.vmem %s1, 24
  %11 = vst [vmem:[%s10] sm:$0xff] %v4
  %s12 = scalar_lea.vmem %s1, 32
  %13 = vst [vmem:[%s12] sm:$0xff] %v4
  %s14 = scalar_lea.vmem %s1, 40
  %15 = vst [vmem:[%s14] sm:$0xff] %v4
  %s16 = scalar_lea.vmem %s1, 48
  %17 = vst [vmem:[%s16] sm:$0xff] %v4
  %s18 = scalar_lea.vmem %s1, 56
  %19 = vst [vmem:[%s18] sm:$0xff] %v4
  %s20 = scalar_lea.vmem %s1, 64
  %21 = vst [vmem:[%s20] sm:$0xff] %v4
  %s22 = scalar_lea.vmem %s1, 72
  %23 = vst [vmem:[%s22] sm:$0xff] %v4
  %s24 = scalar_lea.vmem %s1, 80
  %25 = vst [vmem:[%s24] sm:$0xff] %v4
  %s26 = scalar_lea.vmem %s1, 88
  %27 = vst [vmem:[%s26] sm:$0xff] %v4
  %s28 = scalar_lea.vmem %s1, 96
  %29 = vst [vmem:[%s28] sm:$0xff] %v4
  %s30 = scalar_lea.vmem %s1, 104
  %31 = vst [vmem:[%s30] sm:$0xff] %v4
  %s32 = scalar_lea.vmem %s1, 112
  %33 = vst [vmem:[%s32] sm:$0xff] %v4
  %s34 = scalar_lea.vmem %s1, 120
  %35 = vst [vmem:[%s34] sm:$0xff] %v4

// kernel: tile.18
$region0: #{tile.18}
  %s0 = inlined_call_operand.vmem [shape: f32[128,7], index: 0, kind: input, shape index: {}]
  %s1 = inlined_call_operand.vmem [shape: f32[1,896], index: 1, kind: output, shape index: {}]
  $region1: #{tile.18} parent=0
    #allocation0 [shape = 'u8[28672]{0}', space=vmem, size = 0x7000, scoped, tag = 'scoped mem for output reshape']
    %v2 = vld [vmem:[%s0] sm:$0x1]
    %vm3 = vcmask 56320
    %4 = vst.msk [vmem:[#allocation0] sm:$0x1] %vm3, %v2
    %s5 = scalar_lea.vmem %s0, 73
    %v6 = vld [vmem:[%s5] sm:$0x1]
    %s7 = scalar_lea.vmem %s0, 73
    %v8 = vld [vmem:[%s7] sm:$0x1]
    %vm9 = vcmask 7168
    %v10 = vsel %vm9, %v8, %v6
    %11 = vrot.lane.b32.xlu0 %v10, 127
    %v12 = vpop.permute.xlu0 %11
    %vm13 = vcmask 48128
    %s14 = scalar_lea.vmem [#allocation0], 32
    %15 = vst.msk [vmem:[%s14] sm:$0x1] %vm13, %v12
    %vm16 = vcmask 1048568
    %s17 = scalar_lea.vmem [#allocation0], 24
    %18 = vst.msk [vmem:[%s17] sm:$0x1] %vm16, %v12
    %s19 = scalar_lea.vmem %s0, 18
    %v20 = vld [vmem:[%s19] sm:$0x1]
    %s21 = scalar_lea.vmem %s0, 18
    %v22 = vld [vmem:[%s21] sm:$0x1]
    %vm23 = vcmask 15360
    %v24 = vsel %vm23, %v22, %v20
    %25 = vrot.lane.b32.xlu0 %v24, 126
    %v26 = vpop.permute.xlu0 %25
    %vm27 = vcmask 39936
    %s28 = scalar_lea.vmem [#allocation0], 8
    %29 = vst.msk [vmem:[%s28] sm:$0x1] %vm27, %v26
    %vm30 = vcmask 1048560
    %31 = vst.msk [vmem:[#allocation0] sm:$0x1] %vm30, %v26
    %s32 = scalar_lea.vmem %s0, 91
    %v33 = vld [vmem:[%s32] sm:$0x1]
    %s34 = scalar_lea.vmem %s0, 91
    %v35 = vld [vmem:[%s34] sm:$0x1]
    %vm36 = vcmask 23552
    %v37 = vsel %vm36, %v35, %v33
    %38 = vrot.lane.b32.xlu0 %v37, 125
    %v39 = vpop.permute.xlu0 %38
    %vm40 = vcmask 31744
    %s41 = scalar_lea.vmem [#allocation0], 40
    %42 = vst.msk [vmem:[%s41] sm:$0x1] %vm40, %v39
    %vm43 = vcmask 1048552
    %s44 = scalar_lea.vmem [#allocation0], 32
    %45 = vst.msk [vmem:[%s44] sm:$0x1] %vm43, %v39
    %s46 = scalar_lea.vmem %s0, 36
    %v47 = vld [vmem:[%s46] sm:$0x1]
    %s48 = scalar_lea.vmem %s0, 36
    %v49 = vld [vmem:[%s48] sm:$0x1]
    %vm50 = vcmask 31744
    %v51 = vsel %vm50, %v49, %v47
    %52 = vrot.lane.b32.xlu0 %v51, 124
    %v53 = vpop.permute.xlu0 %52
    %vm54 = vcmask 23552
    %s55 = scalar_lea.vmem [#allocation0], 16
    %56 = vst.msk [vmem:[%s55] sm:$0x1] %vm54, %v53
    %vm57 = vcmask 1048544
    %s58 = scalar_lea.vmem [#allocation0], 8
    %59 = vst.msk [vmem:[%s58] sm:$0x1] %vm57, %v53
    %s60 = scalar_lea.vmem %s0, 109
    %v61 = vld [vmem:[%s60] sm:$0x1]
    %s62 = scalar_lea.vmem %s0, 109
    %v63 = vld [vmem:[%s62] sm:$0x1]
    %vm64 = vcmask 39936
    %v65 = vsel %vm64, %v63, %v61
    %66 = vrot.lane.b32.xlu0 %v65, 123
    %v67 = vpop.permute.xlu0 %66
    %vm68 = vcmask 15360
    %s69 = scalar_lea.vmem [#allocation0], 48
    %70 = vst.msk [vmem:[%s69] sm:$0x1] %vm68, %v67
    %vm71 = vcmask 1048536
    %s72 = scalar_lea.vmem [#allocation0], 40
    %73 = vst.msk [vmem:[%s72] sm:$0x1] %vm71, %v67
    %s74 = scalar_lea.vmem %s0, 54
    %v75 = vld [vmem:[%s74] sm:$0x1]
    %s76 = scalar_lea.vmem %s0, 54
    %v77 = vld [vmem:[%s76] sm:$0x1]
    %vm78 = vcmask 48128
    %v79 = vsel %vm78, %v77, %v75
    %80 = vrot.lane.b32.xlu0 %v79, 122
    %v81 = vpop.permute.xlu0 %80
    %vm82 = vcmask 7168
    %s83 = scalar_lea.vmem [#allocation0], 24
    %84 = vst.msk [vmem:[%s83] sm:$0x1] %vm82, %v81
    %vm85 = vcmask 1048528
    %s86 = scalar_lea.vmem [#allocation0], 16
    %87 = vst.msk [vmem:[%s86] sm:$0x1] %vm85, %v81
    %s88 = scalar_lea.vmem %s0, 127
    %v89 = vld [vmem:[%s88] sm:$0x1]
    %90 = vrot.lane.b32.xlu0 %v89, 121
    %v91 = vpop.permute.xlu0 %90
    %vm92 = vcmask 1048520
    %s93 = scalar_lea.vmem [#allocation0], 48
    %94 = vst.msk [vmem:[%s93] sm:$0x1] %vm92, %v91
    %s95 = scalar_lea.vmem %s0, 72
    %v96 = vld [vmem:[%s95] sm:$0x1]
    %97 = vrot.lane.b32.xlu0 %v96, 120
    %v98 = vpop.permute.xlu0 %97
    %vm99 = vcmask 1040320
    %s100 = scalar_lea.vmem [#allocation0], 24
    %101 = vst.msk [vmem:[%s100] sm:$0x1] %vm99, %v98
    %s102 = scalar_lea.vmem %s0, 17
    %v103 = vld [vmem:[%s102] sm:$0x1]
    %104 = vrot.lane.b32.xlu0 %v103, 119
    %v105 = vpop.permute.xlu0 %104
    %vm106 = vcmask 1032120
    %107 = vst.msk [vmem:[#allocation0] sm:$0x1] %vm106, %v105
    %s108 = scalar_lea.vmem %s0, 90
    %v109 = vld [vmem:[%s108] sm:$0x1]
    %110 = vrot.lane.b32.xlu0 %v109, 118
    %v111 = vpop.permute.xlu0 %110
    %vm112 = vcmask 1023920
    %s113 = scalar_lea.vmem [#allocation0], 32
    %114 = vst.msk [vmem:[%s113] sm:$0x1] %vm112, %v111
    %s115 = scalar_lea.vmem %s0, 35
    %v116 = vld [vmem:[%s115] sm:$0x1]
    %117 = vrot.lane.b32.xlu0 %v116, 117
    %v118 = vpop.permute.xlu0 %117
    %vm119 = vcmask 1015720
    %s120 = scalar_lea.vmem [#allocation0], 8
    %121 = vst.msk [vmem:[%s120] sm:$0x1] %vm119, %v118
    %s122 = scalar_lea.vmem %s0, 108
    %v123 = vld [vmem:[%s122] sm:$0x1]
    %124 = vrot.lane.b32.xlu0 %v123, 116
    %v125 = vpop.permute.xlu0 %124
    %vm126 = vcmask 1007520
    %s127 = scalar_lea.vmem [#allocation0], 40
    %128 = vst.msk [vmem:[%s127] sm:$0x1] %vm126, %v125
    %s129 = scalar_lea.vmem %s0, 53
    %v130 = vld [vmem:[%s129] sm:$0x1]
    %131 = vrot.lane.b32.xlu0 %v130, 115
    %v132 = vpop.permute.xlu0 %131
    %vm133 = vcmask 999320
    %s134 = scalar_lea.vmem [#allocation0], 16
    %135 = vst.msk [vmem:[%s134] sm:$0x1] %vm133, %v132
    %s136 = scalar_lea.vmem %s0, 126
    %v137 = vld [vmem:[%s136] sm:$0x1]
    %138 = vrot.lane.b32.xlu0 %v137, 114
    %v139 = vpop.permute.xlu0 %138
    %vm140 = vcmask 991120
    %s141 = scalar_lea.vmem [#allocation0], 48
    %142 = vst.msk [vmem:[%s141] sm:$0x1] %vm140, %v139
    %s143 = scalar_lea.vmem %s0, 71
    %v144 = vld [vmem:[%s143] sm:$0x1]
    %145 = vrot.lane.b32.xlu0 %v144, 113
    %v146 = vpop.permute.xlu0 %145
    %vm147 = vcmask 982920
    %s148 = scalar_lea.vmem [#allocation0], 24
    %149 = vst.msk [vmem:[%s148] sm:$0x1] %vm147, %v146
    %s150 = scalar_lea.vmem %s0, 16
    %v151 = vld [vmem:[%s150] sm:$0x1]
    %152 = vrot.lane.b32.xlu0 %v151, 112
    %v153 = vpop.permute.xlu0 %152
    %vm154 = vcmask 974720
    %155 = vst.msk [vmem:[#allocation0] sm:$0x1] %vm154, %v153
    %s156 = scalar_lea.vmem %s0, 89
    %v157 = vld [vmem:[%s156] sm:$0x1]
    %158 = vrot.lane.b32.xlu0 %v157, 111
    %v159 = vpop.permute.xlu0 %158
    %vm160 = vcmask 966520
    %s161 = scalar_lea.vmem [#allocation0], 32
    %162 = vst.msk [vmem:[%s161] sm:$0x1] %vm160, %v159
    %s163 = scalar_lea.vmem %s0, 34
    %v164 = vld [vmem:[%s163] sm:$0x1]
    %165 = vrot.lane.b32.xlu0 %v164, 110
    %v166 = vpop.permute.xlu0 %165
    %vm167 = vcmask 958320
    %s168 = scalar_lea.vmem [#allocation0], 8
    %169 = vst.msk [vmem:[%s168] sm:$0x1] %vm167, %v166
    %s170 = scalar_lea.vmem %s0, 107
    %v171 = vld [vmem:[%s170] sm:$0x1]
    %172 = vrot.lane.b32.xlu0 %v171, 109
    %v173 = vpop.permute.xlu0 %172
    %vm174 = vcmask 950120
    %s175 = scalar_lea.vmem [#allocation0], 40
    %176 = vst.msk [vmem:[%s175] sm:$0x1] %vm174, %v173
    %s177 = scalar_lea.vmem %s0, 52
    %v178 = vld [vmem:[%s177] sm:$0x1]
    %179 = vrot.lane.b32.xlu0 %v178, 108
    %v180 = vpop.permute.xlu0 %179
    %vm181 = vcmask 941920
    %s182 = scalar_lea.vmem [#allocation0], 16
    %183 = vst.msk [vmem:[%s182] sm:$0x1] %vm181, %v180
    %s184 = scalar_lea.vmem %s0, 125
    %v185 = vld [vmem:[%s184] sm:$0x1]
    %186 = vrot.lane.b32.xlu0 %v185, 107
    %v187 = vpop.permute.xlu0 %186
    %vm188 = vcmask 933720
    %s189 = scalar_lea.vmem [#allocation0], 48
    %190 = vst.msk [vmem:[%s189] sm:$0x1] %vm188, %v187
    %s191 = scalar_lea.vmem %s0, 70
    %v192 = vld [vmem:[%s191] sm:$0x1]
    %193 = vrot.lane.b32.xlu0 %v192, 106
    %v194 = vpop.permute.xlu0 %193
    %vm195 = vcmask 925520
    %s196 = scalar_lea.vmem [#allocation0], 24
    %197 = vst.msk [vmem:[%s196] sm:$0x1] %vm195, %v194
    %s198 = scalar_lea.vmem %s0, 15
    %v199 = vld [vmem:[%s198] sm:$0x1]
    %200 = vrot.lane.b32.xlu0 %v199, 105
    %v201 = vpop.permute.xlu0 %200
    %vm202 = vcmask 917320
    %203 = vst.msk [vmem:[#allocation0] sm:$0x1] %vm202, %v201
    %s204 = scalar_lea.vmem %s0, 88
    %v205 = vld [vmem:[%s204] sm:$0x1]
    %206 = vrot.lane.b32.xlu0 %v205, 104
    %v207 = vpop.permute.xlu0 %206
    %vm208 = vcmask 909120
    %s209 = scalar_lea.vmem [#allocation0], 32
    %210 = vst.msk [vmem:[%s209] sm:$0x1] %vm208, %v207
    %s211 = scalar_lea.vmem %s0, 33
    %v212 = vld [vmem:[%s211] sm:$0x1]
    %213 = vrot.lane.b32.xlu0 %v212, 103
    %v214 = vpop.permute.xlu0 %213
    %vm215 = vcmask 900920
    %s216 = scalar_lea.vmem [#allocation0], 8
    %217 = vst.msk [vmem:[%s216] sm:$0x1] %vm215, %v214
    %s218 = scalar_lea.vmem %s0, 106
    %v219 = vld [vmem:[%s218] sm:$0x1]
    %220 = vrot.lane.b32.xlu0 %v219, 102
    %v221 = vpop.permute.xlu0 %220
    %vm222 = vcmask 892720
    %s223 = scalar_lea.vmem [#allocation0], 40
    %224 = vst.msk [vmem:[%s223] sm:$0x1] %vm222, %v221
    %s225 = scalar_lea.vmem %s0, 51
    %v226 = vld [vmem:[%s225] sm:$0x1]
    %227 = vrot.lane.b32.xlu0 %v226, 101
    %v228 = vpop.permute.xlu0 %227
    %vm229 = vcmask 884520
    %s230 = scalar_lea.vmem [#allocation0], 16
    %231 = vst.msk [vmem:[%s230] sm:$0x1] %vm229, %v228
    %s232 = scalar_lea.vmem %s0, 124
    %v233 = vld [vmem:[%s232] sm:$0x1]
    %234 = vrot.lane.b32.xlu0 %v233, 100
    %v235 = vpop.permute.xlu0 %234
    %vm236 = vcmask 876320
    %s237 = scalar_lea.vmem [#allocation0], 48
    %238 = vst.msk [vmem:[%s237] sm:$0x1] %vm236, %v235
    %s239 = scalar_lea.vmem %s0, 69
    %v240 = vld [vmem:[%s239] sm:$0x1]
    %241 = vrot.lane.b32.xlu0 %v240, 99
    %v242 = vpop.permute.xlu0 %241
    %vm243 = vcmask 868120
    %s244 = scalar_lea.vmem [#allocation0], 24
    %245 = vst.msk [vmem:[%s244] sm:$0x1] %vm243, %v242
    %s246 = scalar_lea.vmem %s0, 14
    %v247 = vld [vmem:[%s246] sm:$0x1]
    %248 = vrot.lane.b32.xlu0 %v247, 98
    %v249 = vpop.permute.xlu0 %248
    %vm250 = vcmask 859920
    %251 = vst.msk [vmem:[#allocation0] sm:$0x1] %vm250, %v249
    %s252 = scalar_lea.vmem %s0, 87
    %v253 = vld [vmem:[%s252] sm:$0x1]
    %254 = vrot.lane.b32.xlu0 %v253, 97
    %v255 = vpop.permute.xlu0 %254
    %vm256 = vcmask 851720
    %s257 = scalar_lea.vmem [#allocation0], 32
    %258 = vst.msk [vmem:[%s257] sm:$0x1] %vm256, %v255
    %s259 = scalar_lea.vmem %s0, 32
    %v260 = vld [vmem:[%s259] sm:$0x1]
    %261 = vrot.lane.b32.xlu0 %v260, 96
    %v262 = vpop.permute.xlu0 %261
    %vm263 = vcmask 843520
    %s264 = scalar_lea.vmem [#allocation0], 8
    %265 = vst.msk [vmem:[%s264] sm:$0x1] %vm263, %v262
    %s266 = scalar_lea.vmem %s0, 105
    %v267 = vld [vmem:[%s266] sm:$0x1]
    %268 = vrot.lane.b32.xlu0 %v267, 95
    %v269 = vpop.permute.xlu0 %268
    %vm270 = vcmask 835320
    %s271 = scalar_lea.vmem [#allocation0], 40
    %272 = vst.msk [vmem:[%s271] sm:$0x1] %vm270, %v269
    %s273 = scalar_lea.vmem %s0, 50
    %v274 = vld [vmem:[%s273] sm:$0x1]
    %275 = vrot.lane.b32.xlu0 %v274, 94
    %v276 = vpop.permute.xlu0 %275
    %vm277 = vcmask 827120
    %s278 = scalar_lea.vmem [#allocation0], 16
    %279 = vst.msk [vmem:[%s278] sm:$0x1] %vm277, %v276
    %s280 = scalar_lea.vmem %s0, 123
    %v281 = vld [vmem:[%s280] sm:$0x1]
    %282 = vrot.lane.b32.xlu0 %v281, 93
    %v283 = vpop.permute.xlu0 %282
    %vm284 = vcmask 818920
    %s285 = scalar_lea.vmem [#allocation0], 48
    %286 = vst.msk [vmem:[%s285] sm:$0x1] %vm284, %v283
    %s287 = scalar_lea.vmem %s0, 68
    %v288 = vld [vmem:[%s287] sm:$0x1]
    %289 = vrot.lane.b32.xlu0 %v288, 92
    %v290 = vpop.permute.xlu0 %289
    %vm291 = vcmask 810720
    %s292 = scalar_lea.vmem [#allocation0], 24
    %293 = vst.msk [vmem:[%s292] sm:$0x1] %vm291, %v290
    %s294 = scalar_lea.vmem %s0, 13
    %v295 = vld [vmem:[%s294] sm:$0x1]
    %296 = vrot.lane.b32.xlu0 %v295, 91
    %v297 = vpop.permute.xlu0 %296
    %vm298 = vcmask 802520
    %299 = vst.msk [vmem:[#allocation0] sm:$0x1] %vm298, %v297
    %s300 = scalar_lea.vmem %s0, 86
    %v301 = vld [vmem:[%s300] sm:$0x1]
    %302 = vrot.lane.b32.xlu0 %v301, 90
    %v303 = vpop.permute.xlu0 %302
    %vm304 = vcmask 794320
    %s305 = scalar_lea.vmem [#allocation0], 32
    %306 = vst.msk [vmem:[%s305] sm:$0x1] %vm304, %v303
    %s307 = scalar_lea.vmem %s0, 31
    %v308 = vld [vmem:[%s307] sm:$0x1]
    %309 = vrot.lane.b32.xlu0 %v308, 89
    %v310 = vpop.permute.xlu0 %309
    %vm311 = vcmask 786120
    %s312 = scalar_lea.vmem [#allocation0], 8
    %313 = vst.msk [vmem:[%s312] sm:$0x1] %vm311, %v310
    %s314 = scalar_lea.vmem %s0, 104
    %v315 = vld [vmem:[%s314] sm:$0x1]
    %316 = vrot.lane.b32.xlu0 %v315, 88
    %v317 = vpop.permute.xlu0 %316
    %vm318 = vcmask 777920
    %s319 = scalar_lea.vmem [#allocation0], 40
    %320 = vst.msk [vmem:[%s319] sm:$0x1] %vm318, %v317
    %s321 = scalar_lea.vmem %s0, 49
    %v322 = vld [vmem:[%s321] sm:$0x1]
    %323 = vrot.lane.b32.xlu0 %v322, 87
    %v324 = vpop.permute.xlu0 %323
    %vm325 = vcmask 769720
    %s326 = scalar_lea.vmem [#allocation0], 16
    %327 = vst.msk [vmem:[%s326] sm:$0x1] %vm325, %v324
    %s328 = scalar_lea.vmem %s0, 122
    %v329 = vld [vmem:[%s328] sm:$0x1]
    %330 = vrot.lane.b32.xlu0 %v329, 86
    %v331 = vpop.permute.xlu0 %330
    %vm332 = vcmask 761520
    %s333 = scalar_lea.vmem [#allocation0], 48
    %334 = vst.msk [vmem:[%s333] sm:$0x1] %vm332, %v331
    %s335 = scalar_lea.vmem %s0, 67
    %v336 = vld [vmem:[%s335] sm:$0x1]
    %337 = vrot.lane.b32.xlu0 %v336, 85
    %v338 = vpop.permute.xlu0 %337
    %vm339 = vcmask 753320
    %s340 = scalar_lea.vmem [#allocation0], 24
    %341 = vst.msk [vmem:[%s340] sm:$0x1] %vm339, %v338
    %s342 = scalar_lea.vmem %s0, 12
    %v343 = vld [vmem:[%s342] sm:$0x1]
    %344 = vrot.lane.b32.xlu0 %v343, 84
    %v345 = vpop.permute.xlu0 %344
    %vm346 = vcmask 745120
    %347 = vst.msk [vmem:[#allocation0] sm:$0x1] %vm346, %v345
    %s348 = scalar_lea.vmem %s0, 85
    %v349 = vld [vmem:[%s348] sm:$0x1]
    %350 = vrot.lane.b32.xlu0 %v349, 83
    %v351 = vpop.permute.xlu0 %350
    %vm352 = vcmask 736920
    %s353 = scalar_lea.vmem [#allocation0], 32
    %354 = vst.msk [vmem:[%s353] sm:$0x1] %vm352, %v351
    %s355 = scalar_lea.vmem %s0, 30
    %v356 = vld [vmem:[%s355] sm:$0x1]
    %357 = vrot.lane.b32.xlu0 %v356, 82
    %v358 = vpop.permute.xlu0 %357
    %vm359 = vcmask 728720
    %s360 = scalar_lea.vmem [#allocation0], 8
    %361 = vst.msk [vmem:[%s360] sm:$0x1] %vm359, %v358
    %s362 = scalar_lea.vmem %s0, 103
    %v363 = vld [vmem:[%s362] sm:$0x1]
    %364 = vrot.lane.b32.xlu0 %v363, 81
    %v365 = vpop.permute.xlu0 %364
    %vm366 = vcmask 720520
    %s367 = scalar_lea.vmem [#allocation0], 40
    %368 = vst.msk [vmem:[%s367] sm:$0x1] %vm366, %v365
    %s369 = scalar_lea.vmem %s0, 48
    %v370 = vld [vmem:[%s369] sm:$0x1]
    %371 = vrot.lane.b32.xlu0 %v370, 80
    %v372 = vpop.permute.xlu0 %371
    %vm373 = vcmask 712320
    %s374 = scalar_lea.vmem [#allocation0], 16
    %375 = vst.msk [vmem:[%s374] sm:$0x1] %vm373, %v372
    %s376 = scalar_lea.vmem %s0, 121
    %v377 = vld [vmem:[%s376] sm:$0x1]
    %378 = vrot.lane.b32.xlu0 %v377, 79
    %v379 = vpop.permute.xlu0 %378
    %vm380 = vcmask 704120
    %s381 = scalar_lea.vmem [#allocation0], 48
    %382 = vst.msk [vmem:[%s381] sm:$0x1] %vm380, %v379
    %s383 = scalar_lea.vmem %s0, 66
    %v384 = vld [vmem:[%s383] sm:$0x1]
    %385 = vrot.lane.b32.xlu0 %v384, 78
    %v386 = vpop.permute.xlu0 %385
    %vm387 = vcmask 695920
    %s388 = scalar_lea.vmem [#allocation0], 24
    %389 = vst.msk [vmem:[%s388] sm:$0x1] %vm387, %v386
    %s390 = scalar_lea.vmem %s0, 11
    %v391 = vld [vmem:[%s390] sm:$0x1]
    %392 = vrot.lane.b32.xlu0 %v391, 77
    %v393 = vpop.permute.xlu0 %392
    %vm394 = vcmask 687720
    %395 = vst.msk [vmem:[#allocation0] sm:$0x1] %vm394, %v393
    %s396 = scalar_lea.vmem %s0, 84
    %v397 = vld [vmem:[%s396] sm:$0x1]
    %398 = vrot.lane.b32.xlu0 %v397, 76
    %v399 = vpop.permute.xlu0 %398
    %vm400 = vcmask 679520
    %s401 = scalar_lea.vmem [#allocation0], 32
    %402 = vst.msk [vmem:[%s401] sm:$0x1] %vm400, %v399
    %s403 = scalar_lea.vmem %s0, 29
    %v404 = vld [vmem:[%s403] sm:$0x1]
    %405 = vrot.lane.b32.xlu0 %v404, 75
    %v406 = vpop.permute.xlu0 %405
    %vm407 = vcmask 671320
    %s408 = scalar_lea.vmem [#allocation0], 8
    %409 = vst.msk [vmem:[%s408] sm:$0x1] %vm407, %v406
    %s410 = scalar_lea.vmem %s0, 102
    %v411 = vld [vmem:[%s410] sm:$0x1]
    %412 = vrot.lane.b32.xlu0 %v411, 74
    %v413 = vpop.permute.xlu0 %412
    %vm414 = vcmask 663120
    %s415 = scalar_lea.vmem [#allocation0], 40
    %416 = vst.msk [vmem:[%s415] sm:$0x1] %vm414, %v413
    %s417 = scalar_lea.vmem %s0, 47
    %v418 = vld [vmem:[%s417] sm:$0x1]
    %419 = vrot.lane.b32.xlu0 %v418, 73
    %v420 = vpop.permute.xlu0 %419
    %vm421 = vcmask 654920
    %s422 = scalar_lea.vmem [#allocation0], 16
    %423 = vst.msk [vmem:[%s422] sm:$0x1] %vm421, %v420
    %s424 = scalar_lea.vmem %s0, 120
    %v425 = vld [vmem:[%s424] sm:$0x1]
    %426 = vrot.lane.b32.xlu0 %v425, 72
    %v427 = vpop.permute.xlu0 %426
    %vm428 = vcmask 646720
    %s429 = scalar_lea.vmem [#allocation0], 48
    %430 = vst.msk [vmem:[%s429] sm:$0x1] %vm428, %v427
    %s431 = scalar_lea.vmem %s0, 65
    %v432 = vld [vmem:[%s431] sm:$0x1]
    %433 = vrot.lane.b32.xlu0 %v432, 71
    %v434 = vpop.permute.xlu0 %433
    %vm435 = vcmask 638520
    %s436 = scalar_lea.vmem [#allocation0], 24
    %437 = vst.msk [vmem:[%s436] sm:$0x1] %vm435, %v434
    %s438 = scalar_lea.vmem %s0, 10
    %v439 = vld [vmem:[%s438] sm:$0x1]
    %440 = vrot.lane.b32.xlu0 %v439, 70
    %v441 = vpop.permute.xlu0 %440
    %vm442 = vcmask 630320
    %443 = vst.msk [vmem:[#allocation0] sm:$0x1] %vm442, %v441
    %s444 = scalar_lea.vmem %s0, 83
    %v445 = vld [vmem:[%s444] sm:$0x1]
    %446 = vrot.lane.b32.xlu0 %v445, 69
    %v447 = vpop.permute.xlu0 %446
    %vm448 = vcmask 622120
    %s449 = scalar_lea.vmem [#allocation0], 32
    %450 = vst.msk [vmem:[%s449] sm:$0x1] %vm448, %v447
    %s451 = scalar_lea.vmem %s0, 28
    %v452 = vld [vmem:[%s451] sm:$0x1]
    %453 = vrot.lane.b32.xlu0 %v452, 68
    %v454 = vpop.permute.xlu0 %453
    %vm455 = vcmask 613920
    %s456 = scalar_lea.vmem [#allocation0], 8
    %457 = vst.msk [vmem:[%s456] sm:$0x1] %vm455, %v454
    %s458 = scalar_lea.vmem %s0, 101
    %v459 = vld [vmem:[%s458] sm:$0x1]
    %460 = vrot.lane.b32.xlu0 %v459, 67
    %v461 = vpop.permute.xlu0 %460
    %vm462 = vcmask 605720
    %s463 = scalar_lea.vmem [#allocation0], 40
    %464 = vst.msk [vmem:[%s463] sm:$0x1] %vm462, %v461
    %s465 = scalar_lea.vmem %s0, 46
    %v466 = vld [vmem:[%s465] sm:$0x1]
    %467 = vrot.lane.b32.xlu0 %v466, 66
    %v468 = vpop.permute.xlu0 %467
    %vm469 = vcmask 597520
    %s470 = scalar_lea.vmem [#allocation0], 16
    %471 = vst.msk [vmem:[%s470] sm:$0x1] %vm469, %v468
    %s472 = scalar_lea.vmem %s0, 119
    %v473 = vld [vmem:[%s472] sm:$0x1]
    %474 = vrot.lane.b32.xlu0 %v473, 65
    %v475 = vpop.permute.xlu0 %474
    %vm476 = vcmask 589320
    %s477 = scalar_lea.vmem [#allocation0], 48
    %478 = vst.msk [vmem:[%s477] sm:$0x1] %vm476, %v475
    %s479 = scalar_lea.vmem %s0, 64
    %v480 = vld [vmem:[%s479] sm:$0x1]
    %481 = vrot.lane.b32.xlu0 %v480, 64
    %v482 = vpop.permute.xlu0 %481
    %vm483 = vcmask 581120
    %s484 = scalar_lea.vmem [#allocation0], 24
    %485 = vst.msk [vmem:[%s484] sm:$0x1] %vm483, %v482
    %s486 = scalar_lea.vmem %s0, 9
    %v487 = vld [vmem:[%s486] sm:$0x1]
    %488 = vrot.lane.b32.xlu0 %v487, 63
    %v489 = vpop.permute.xlu0 %488
    %vm490 = vcmask 572920
    %491 = vst.msk [vmem:[#allocation0] sm:$0x1] %vm490, %v489
    %s492 = scalar_lea.vmem %s0, 82
    %v493 = vld [vmem:[%s492] sm:$0x1]
    %494 = vrot.lane.b32.xlu0 %v493, 62
    %v495 = vpop.permute.xlu0 %494
    %vm496 = vcmask 564720
    %s497 = scalar_lea.vmem [#allocation0], 32
    %498 = vst.msk [vmem:[%s497] sm:$0x1] %vm496, %v495
    %s499 = scalar_lea.vmem %s0, 27
    %v500 = vld [vmem:[%s499] sm:$0x1]
    %501 = vrot.lane.b32.xlu0 %v500, 61
    %v502 = vpop.permute.xlu0 %501
    %vm503 = vcmask 556520
    %s504 = scalar_lea.vmem [#allocation0], 8
    %505 = vst.msk [vmem:[%s504] sm:$0x1] %vm503, %v502
    %s506 = scalar_lea.vmem %s0, 100
    %v507 = vld [vmem:[%s506] sm:$0x1]
    %508 = vrot.lane.b32.xlu0 %v507, 60
    %v509 = vpop.permute.xlu0 %508
    %vm510 = vcmask 548320
    %s511 = scalar_lea.vmem [#allocation0], 40
    %512 = vst.msk [vmem:[%s511] sm:$0x1] %vm510, %v509
    %s513 = scalar_lea.vmem %s0, 45
    %v514 = vld [vmem:[%s513] sm:$0x1]
    %515 = vrot.lane.b32.xlu0 %v514, 59
    %v516 = vpop.permute.xlu0 %515
    %vm517 = vcmask 540120
    %s518 = scalar_lea.vmem [#allocation0], 16
    %519 = vst.msk [vmem:[%s518] sm:$0x1] %vm517, %v516
    %s520 = scalar_lea.vmem %s0, 118
    %v521 = vld [vmem:[%s520] sm:$0x1]
    %522 = vrot.lane.b32.xlu0 %v521, 58
    %v523 = vpop.permute.xlu0 %522
    %vm524 = vcmask 531920
    %s525 = scalar_lea.vmem [#allocation0], 48
    %526 = vst.msk [vmem:[%s525] sm:$0x1] %vm524, %v523
    %s527 = scalar_lea.vmem %s0, 63
    %v528 = vld [vmem:[%s527] sm:$0x1]
    %529 = vrot.lane.b32.xlu0 %v528, 57
    %v530 = vpop.permute.xlu0 %529
    %vm531 = vcmask 523720
    %s532 = scalar_lea.vmem [#allocation0], 24
    %533 = vst.msk [vmem:[%s532] sm:$0x1] %vm531, %v530
    %s534 = scalar_lea.vmem %s0, 8
    %v535 = vld [vmem:[%s534] sm:$0x1]
    %536 = vrot.lane.b32.xlu0 %v535, 56
    %v537 = vpop.permute.xlu0 %536
    %vm538 = vcmask 515520
    %539 = vst.msk [vmem:[#allocation0] sm:$0x1] %vm538, %v537
    %s540 = scalar_lea.vmem %s0, 81
    %v541 = vld [vmem:[%s540] sm:$0x1]
    %542 = vrot.lane.b32.xlu0 %v541, 55
    %v543 = vpop.permute.xlu0 %542
    %vm544 = vcmask 507320
    %s545 = scalar_lea.vmem [#allocation0], 32
    %546 = vst.msk [vmem:[%s545] sm:$0x1] %vm544, %v543
    %s547 = scalar_lea.vmem %s0, 26
    %v548 = vld [vmem:[%s547] sm:$0x1]
    %549 = vrot.lane.b32.xlu0 %v548, 54
    %v550 = vpop.permute.xlu0 %549
    %vm551 = vcmask 499120
    %s552 = scalar_lea.vmem [#allocation0], 8
    %553 = vst.msk [vmem:[%s552] sm:$0x1] %vm551, %v550
    %s554 = scalar_lea.vmem %s0, 99
    %v555 = vld [vmem:[%s554] sm:$0x1]
    %556 = vrot.lane.b32.xlu0 %v555, 53
    %v557 = vpop.permute.xlu0 %556
    %vm558 = vcmask 490920
    %s559 = scalar_lea.vmem [#allocation0], 40
    %560 = vst.msk [vmem:[%s559] sm:$0x1] %vm558, %v557
    %s561 = scalar_lea.vmem %s0, 44
    %v562 = vld [vmem:[%s561] sm:$0x1]
    %563 = vrot.lane.b32.xlu0 %v562, 52
    %v564 = vpop.permute.xlu0 %563
    %vm565 = vcmask 482720
    %s566 = scalar_lea.vmem [#allocation0], 16
    %567 = vst.msk [vmem:[%s566] sm:$0x1] %vm565, %v564
    %s568 = scalar_lea.vmem %s0, 117
    %v569 = vld [vmem:[%s568] sm:$0x1]
    %570 = vrot.lane.b32.xlu0 %v569, 51
    %v571 = vpop.permute.xlu0 %570
    %vm572 = vcmask 474520
    %s573 = scalar_lea.vmem [#allocation0], 48
    %574 = vst.msk [vmem:[%s573] sm:$0x1] %vm572, %v571
    %s575 = scalar_lea.vmem %s0, 62
    %v576 = vld [vmem:[%s575] sm:$0x1]
    %577 = vrot.lane.b32.xlu0 %v576, 50
    %v578 = vpop.permute.xlu0 %577
    %vm579 = vcmask 466320
    %s580 = scalar_lea.vmem [#allocation0], 24
    %581 = vst.msk [vmem:[%s580] sm:$0x1] %vm579, %v578
    %s582 = scalar_lea.vmem %s0, 7
    %v583 = vld [vmem:[%s582] sm:$0x1]
    %584 = vrot.lane.b32.xlu0 %v583, 49
    %v585 = vpop.permute.xlu0 %584
    %vm586 = vcmask 458120
    %587 = vst.msk [vmem:[#allocation0] sm:$0x1] %vm586, %v585
    %s588 = scalar_lea.vmem %s0, 80
    %v589 = vld [vmem:[%s588] sm:$0x1]
    %590 = vrot.lane.b32.xlu0 %v589, 48
    %v591 = vpop.permute.xlu0 %590
    %vm592 = vcmask 449920
    %s593 = scalar_lea.vmem [#allocation0], 32
    %594 = vst.msk [vmem:[%s593] sm:$0x1] %vm592, %v591
    %s595 = scalar_lea.vmem %s0, 25
    %v596 = vld [vmem:[%s595] sm:$0x1]
    %597 = vrot.lane.b32.xlu0 %v596, 47
    %v598 = vpop.permute.xlu0 %597
    %vm599 = vcmask 441720
    %s600 = scalar_lea.vmem [#allocation0], 8
    %601 = vst.msk [vmem:[%s600] sm:$0x1] %vm599, %v598
    %s602 = scalar_lea.vmem %s0, 98
    %v603 = vld [vmem:[%s602] sm:$0x1]
    %604 = vrot.lane.b32.xlu0 %v603, 46
    %v605 = vpop.permute.xlu0 %604
    %vm606 = vcmask 433520
    %s607 = scalar_lea.vmem [#allocation0], 40
    %608 = vst.msk [vmem:[%s607] sm:$0x1] %vm606, %v605
    %s609 = scalar_lea.vmem %s0, 43
    %v610 = vld [vmem:[%s609] sm:$0x1]
    %611 = vrot.lane.b32.xlu0 %v610, 45
    %v612 = vpop.permute.xlu0 %611
    %vm613 = vcmask 425320
    %s614 = scalar_lea.vmem [#allocation0], 16
    %615 = vst.msk [vmem:[%s614] sm:$0x1] %vm613, %v612
    %s616 = scalar_lea.vmem %s0, 116
    %v617 = vld [vmem:[%s616] sm:$0x1]
    %618 = vrot.lane.b32.xlu0 %v617, 44
    %v619 = vpop.permute.xlu0 %618
    %vm620 = vcmask 417120
    %s621 = scalar_lea.vmem [#allocation0], 48
    %622 = vst.msk [vmem:[%s621] sm:$0x1] %vm620, %v619
    %s623 = scalar_lea.vmem %s0, 61
    %v624 = vld [vmem:[%s623] sm:$0x1]
    %625 = vrot.lane.b32.xlu0 %v624, 43
    %v626 = vpop.permute.xlu0 %625
    %vm627 = vcmask 408920
    %s628 = scalar_lea.vmem [#allocation0], 24
    %629 = vst.msk [vmem:[%s628] sm:$0x1] %vm627, %v626
    %s630 = scalar_lea.vmem %s0, 6
    %v631 = vld [vmem:[%s630] sm:$0x1]
    %632 = vrot.lane.b32.xlu0 %v631, 42
    %v633 = vpop.permute.xlu0 %632
    %vm634 = vcmask 400720
    %635 = vst.msk [vmem:[#allocation0] sm:$0x1] %vm634, %v633
    %s636 = scalar_lea.vmem %s0, 79
    %v637 = vld [vmem:[%s636] sm:$0x1]
    %638 = vrot.lane.b32.xlu0 %v637, 41
    %v639 = vpop.permute.xlu0 %638
    %vm640 = vcmask 392520
    %s641 = scalar_lea.vmem [#allocation0], 32
    %642 = vst.msk [vmem:[%s641] sm:$0x1] %vm640, %v639
    %s643 = scalar_lea.vmem %s0, 24
    %v644 = vld [vmem:[%s643] sm:$0x1]
    %645 = vrot.lane.b32.xlu0 %v644, 40
    %v646 = vpop.permute.xlu0 %645
    %vm647 = vcmask 384320
    %s648 = scalar_lea.vmem [#allocation0], 8
    %649 = vst.msk [vmem:[%s648] sm:$0x1] %vm647, %v646
    %s650 = scalar_lea.vmem %s0, 97
    %v651 = vld [vmem:[%s650] sm:$0x1]
    %652 = vrot.lane.b32.xlu0 %v651, 39
    %v653 = vpop.permute.xlu0 %652
    %vm654 = vcmask 376120
    %s655 = scalar_lea.vmem [#allocation0], 40
    %656 = vst.msk [vmem:[%s655] sm:$0x1] %vm654, %v653
    %s657 = scalar_lea.vmem %s0, 42
    %v658 = vld [vmem:[%s657] sm:$0x1]
    %659 = vrot.lane.b32.xlu0 %v658, 38
    %v660 = vpop.permute.xlu0 %659
    %vm661 = vcmask 367920
    %s662 = scalar_lea.vmem [#allocation0], 16
    %663 = vst.msk [vmem:[%s662] sm:$0x1] %vm661, %v660
    %s664 = scalar_lea.vmem %s0, 115
    %v665 = vld [vmem:[%s664] sm:$0x1]
    %666 = vrot.lane.b32.xlu0 %v665, 37
    %v667 = vpop.permute.xlu0 %666
    %vm668 = vcmask 359720
    %s669 = scalar_lea.vmem [#allocation0], 48
    %670 = vst.msk [vmem:[%s669] sm:$0x1] %vm668, %v667
    %s671 = scalar_lea.vmem %s0, 60
    %v672 = vld [vmem:[%s671] sm:$0x1]
    %673 = vrot.lane.b32.xlu0 %v672, 36
    %v674 = vpop.permute.xlu0 %673
    %vm675 = vcmask 351520
    %s676 = scalar_lea.vmem [#allocation0], 24
    %677 = vst.msk [vmem:[%s676] sm:$0x1] %vm675, %v674
    %s678 = scalar_lea.vmem %s0, 5
    %v679 = vld [vmem:[%s678] sm:$0x1]
    %680 = vrot.lane.b32.xlu0 %v679, 35
    %v681 = vpop.permute.xlu0 %680
    %vm682 = vcmask 343320
    %683 = vst.msk [vmem:[#allocation0] sm:$0x1] %vm682, %v681
    %s684 = scalar_lea.vmem %s0, 78
    %v685 = vld [vmem:[%s684] sm:$0x1]
    %686 = vrot.lane.b32.xlu0 %v685, 34
    %v687 = vpop.permute.xlu0 %686
    %vm688 = vcmask 335120
    %s689 = scalar_lea.vmem [#allocation0], 32
    %690 = vst.msk [vmem:[%s689] sm:$0x1] %vm688, %v687
    %s691 = scalar_lea.vmem %s0, 23
    %v692 = vld [vmem:[%s691] sm:$0x1]
    %693 = vrot.lane.b32.xlu0 %v692, 33
    %v694 = vpop.permute.xlu0 %693
    %vm695 = vcmask 326920
    %s696 = scalar_lea.vmem [#allocation0], 8
    %697 = vst.msk [vmem:[%s696] sm:$0x1] %vm695, %v694
    %s698 = scalar_lea.vmem %s0, 96
    %v699 = vld [vmem:[%s698] sm:$0x1]
    %700 = vrot.lane.b32.xlu0 %v699, 32
    %v701 = vpop.permute.xlu0 %700
    %vm702 = vcmask 318720
    %s703 = scalar_lea.vmem [#allocation0], 40
    %704 = vst.msk [vmem:[%s703] sm:$0x1] %vm702, %v701
    %s705 = scalar_lea.vmem %s0, 41
    %v706 = vld [vmem:[%s705] sm:$0x1]
    %707 = vrot.lane.b32.xlu0 %v706, 31
    %v708 = vpop.permute.xlu0 %707
    %vm709 = vcmask 310520
    %s710 = scalar_lea.vmem [#allocation0], 16
    %711 = vst.msk [vmem:[%s710] sm:$0x1] %vm709, %v708
    %s712 = scalar_lea.vmem %s0, 114
    %v713 = vld [vmem:[%s712] sm:$0x1]
    %714 = vrot.lane.b32.xlu0 %v713, 30
    %v715 = vpop.permute.xlu0 %714
    %vm716 = vcmask 302320
    %s717 = scalar_lea.vmem [#allocation0], 48
    %718 = vst.msk [vmem:[%s717] sm:$0x1] %vm716, %v715
    %s719 = scalar_lea.vmem %s0, 59
    %v720 = vld [vmem:[%s719] sm:$0x1]
    %721 = vrot.lane.b32.xlu0 %v720, 29
    %v722 = vpop.permute.xlu0 %721
    %vm723 = vcmask 294120
    %s724 = scalar_lea.vmem [#allocation0], 24
    %725 = vst.msk [vmem:[%s724] sm:$0x1] %vm723, %v722
    %s726 = scalar_lea.vmem %s0, 4
    %v727 = vld [vmem:[%s726] sm:$0x1]
    %728 = vrot.lane.b32.xlu0 %v727, 28
    %v729 = vpop.permute.xlu0 %728
    %vm730 = vcmask 285920
    %731 = vst.msk [vmem:[#allocation0] sm:$0x1] %vm730, %v729
    %s732 = scalar_lea.vmem %s0, 77
    %v733 = vld [vmem:[%s732] sm:$0x1]
    %734 = vrot.lane.b32.xlu0 %v733, 27
    %v735 = vpop.permute.xlu0 %734
    %vm736 = vcmask 277720
    %s737 = scalar_lea.vmem [#allocation0], 32
    %738 = vst.msk [vmem:[%s737] sm:$0x1] %vm736, %v735
    %s739 = scalar_lea.vmem %s0, 22
    %v740 = vld [vmem:[%s739] sm:$0x1]
    %741 = vrot.lane.b32.xlu0 %v740, 26
    %v742 = vpop.permute.xlu0 %741
    %vm743 = vcmask 269520
    %s744 = scalar_lea.vmem [#allocation0], 8
    %745 = vst.msk [vmem:[%s744] sm:$0x1] %vm743, %v742
    %s746 = scalar_lea.vmem %s0, 95
    %v747 = vld [vmem:[%s746] sm:$0x1]
    %748 = vrot.lane.b32.xlu0 %v747, 25
    %v749 = vpop.permute.xlu0 %748
    %vm750 = vcmask 261320
    %s751 = scalar_lea.vmem [#allocation0], 40
    %752 = vst.msk [vmem:[%s751] sm:$0x1] %vm750, %v749
    %s753 = scalar_lea.vmem %s0, 40
    %v754 = vld [vmem:[%s753] sm:$0x1]
    %755 = vrot.lane.b32.xlu0 %v754, 24
    %v756 = vpop.permute.xlu0 %755
    %vm757 = vcmask 253120
    %s758 = scalar_lea.vmem [#allocation0], 16
    %759 = vst.msk [vmem:[%s758] sm:$0x1] %vm757, %v756
    %s760 = scalar_lea.vmem %s0, 113
    %v761 = vld [vmem:[%s760] sm:$0x1]
    %762 = vrot.lane.b32.xlu0 %v761, 23
    %v763 = vpop.permute.xlu0 %762
    %vm764 = vcmask 244920
    %s765 = scalar_lea.vmem [#allocation0], 48
    %766 = vst.msk [vmem:[%s765] sm:$0x1] %vm764, %v763
    %s767 = scalar_lea.vmem %s0, 58
    %v768 = vld [vmem:[%s767] sm:$0x1]
    %769 = vrot.lane.b32.xlu0 %v768, 22
    %v770 = vpop.permute.xlu0 %769
    %vm771 = vcmask 236720
    %s772 = scalar_lea.vmem [#allocation0], 24
    %773 = vst.msk [vmem:[%s772] sm:$0x1] %vm771, %v770
    %s774 = scalar_lea.vmem %s0, 3
    %v775 = vld [vmem:[%s774] sm:$0x1]
    %776 = vrot.lane.b32.xlu0 %v775, 21
    %v777 = vpop.permute.xlu0 %776
    %vm778 = vcmask 228520
    %779 = vst.msk [vmem:[#allocation0] sm:$0x1] %vm778, %v777
    %s780 = scalar_lea.vmem %s0, 76
    %v781 = vld [vmem:[%s780] sm:$0x1]
    %782 = vrot.lane.b32.xlu0 %v781, 20
    %v783 = vpop.permute.xlu0 %782
    %vm784 = vcmask 220320
    %s785 = scalar_lea.vmem [#allocation0], 32
    %786 = vst.msk [vmem:[%s785] sm:$0x1] %vm784, %v783
    %s787 = scalar_lea.vmem %s0, 21
    %v788 = vld [vmem:[%s787] sm:$0x1]
    %789 = vrot.lane.b32.xlu0 %v788, 19
    %v790 = vpop.permute.xlu0 %789
    %vm791 = vcmask 212120
    %s792 = scalar_lea.vmem [#allocation0], 8
    %793 = vst.msk [vmem:[%s792] sm:$0x1] %vm791, %v790
    %s794 = scalar_lea.vmem %s0, 94
    %v795 = vld [vmem:[%s794] sm:$0x1]
    %796 = vrot.lane.b32.xlu0 %v795, 18
    %v797 = vpop.permute.xlu0 %796
    %vm798 = vcmask 203920
    %s799 = scalar_lea.vmem [#allocation0], 40
    %800 = vst.msk [vmem:[%s799] sm:$0x1] %vm798, %v797
    %s801 = scalar_lea.vmem %s0, 39
    %v802 = vld [vmem:[%s801] sm:$0x1]
    %803 = vrot.lane.b32.xlu0 %v802, 17
    %v804 = vpop.permute.xlu0 %803
    %vm805 = vcmask 195720
    %s806 = scalar_lea.vmem [#allocation0], 16
    %807 = vst.msk [vmem:[%s806] sm:$0x1] %vm805, %v804
    %s808 = scalar_lea.vmem %s0, 112
    %v809 = vld [vmem:[%s808] sm:$0x1]
    %810 = vrot.lane.b32.xlu0 %v809, 16
    %v811 = vpop.permute.xlu0 %810
    %vm812 = vcmask 187520
    %s813 = scalar_lea.vmem [#allocation0], 48
    %814 = vst.msk [vmem:[%s813] sm:$0x1] %vm812, %v811
    %s815 = scalar_lea.vmem %s0, 57
    %v816 = vld [vmem:[%s815] sm:$0x1]
    %817 = vrot.lane.b32.xlu0 %v816, 15
    %v818 = vpop.permute.xlu0 %817
    %vm819 = vcmask 179320
    %s820 = scalar_lea.vmem [#allocation0], 24
    %821 = vst.msk [vmem:[%s820] sm:$0x1] %vm819, %v818
    %s822 = scalar_lea.vmem %s0, 2
    %v823 = vld [vmem:[%s822] sm:$0x1]
    %824 = vrot.lane.b32.xlu0 %v823, 14
    %v825 = vpop.permute.xlu0 %824
    %vm826 = vcmask 171120
    %827 = vst.msk [vmem:[#allocation0] sm:$0x1] %vm826, %v825
    %s828 = scalar_lea.vmem %s0, 75
    %v829 = vld [vmem:[%s828] sm:$0x1]
    %830 = vrot.lane.b32.xlu0 %v829, 13
    %v831 = vpop.permute.xlu0 %830
    %vm832 = vcmask 162920
    %s833 = scalar_lea.vmem [#allocation0], 32
    %834 = vst.msk [vmem:[%s833] sm:$0x1] %vm832, %v831
    %s835 = scalar_lea.vmem %s0, 20
    %v836 = vld [vmem:[%s835] sm:$0x1]
    %837 = vrot.lane.b32.xlu0 %v836, 12
    %v838 = vpop.permute.xlu0 %837
    %vm839 = vcmask 154720
    %s840 = scalar_lea.vmem [#allocation0], 8
    %841 = vst.msk [vmem:[%s840] sm:$0x1] %vm839, %v838
    %s842 = scalar_lea.vmem %s0, 93
    %v843 = vld [vmem:[%s842] sm:$0x1]
    %844 = vrot.lane.b32.xlu0 %v843, 11
    %v845 = vpop.permute.xlu0 %844
    %vm846 = vcmask 146520
    %s847 = scalar_lea.vmem [#allocation0], 40
    %848 = vst.msk [vmem:[%s847] sm:$0x1] %vm846, %v845
    %s849 = scalar_lea.vmem %s0, 38
    %v850 = vld [vmem:[%s849] sm:$0x1]
    %851 = vrot.lane.b32.xlu0 %v850, 10
    %v852 = vpop.permute.xlu0 %851
    %vm853 = vcmask 138320
    %s854 = scalar_lea.vmem [#allocation0], 16
    %855 = vst.msk [vmem:[%s854] sm:$0x1] %vm853, %v852
    %s856 = scalar_lea.vmem %s0, 111
    %v857 = vld [vmem:[%s856] sm:$0x1]
    %858 = vrot.lane.b32.xlu0 %v857, 9
    %v859 = vpop.permute.xlu0 %858
    %vm860 = vcmask 130120
    %s861 = scalar_lea.vmem [#allocation0], 48
    %862 = vst.msk [vmem:[%s861] sm:$0x1] %vm860, %v859
    %s863 = scalar_lea.vmem %s0, 56
    %v864 = vld [vmem:[%s863] sm:$0x1]
    %865 = vrot.lane.b32.xlu0 %v864, 8
    %v866 = vpop.permute.xlu0 %865
    %vm867 = vcmask 121920
    %s868 = scalar_lea.vmem [#allocation0], 24
    %869 = vst.msk [vmem:[%s868] sm:$0x1] %vm867, %v866
    %s870 = scalar_lea.vmem %s0, 1
    %v871 = vld [vmem:[%s870] sm:$0x1]
    %872 = vrot.lane.b32.xlu0 %v871, 7
    %v873 = vpop.permute.xlu0 %872
    %vm874 = vcmask 113720
    %875 = vst.msk [vmem:[#allocation0] sm:$0x1] %vm874, %v873
    %s876 = scalar_lea.vmem %s0, 74
    %v877 = vld [vmem:[%s876] sm:$0x1]
    %878 = vrot.lane.b32.xlu0 %v877, 6
    %v879 = vpop.permute.xlu0 %878
    %vm880 = vcmask 105520
    %s881 = scalar_lea.vmem [#allocation0], 32
    %882 = vst.msk [vmem:[%s881] sm:$0x1] %vm880, %v879
    %s883 = scalar_lea.vmem %s0, 19
    %v884 = vld [vmem:[%s883] sm:$0x1]
    %885 = vrot.lane.b32.xlu0 %v884, 5
    %v886 = vpop.permute.xlu0 %885
    %vm887 = vcmask 97320
    %s888 = scalar_lea.vmem [#allocation0], 8
    %889 = vst.msk [vmem:[%s888] sm:$0x1] %vm887, %v886
    %s890 = scalar_lea.vmem %s0, 92
    %v891 = vld [vmem:[%s890] sm:$0x1]
    %892 = vrot.lane.b32.xlu0 %v891, 4
    %v893 = vpop.permute.xlu0 %892
    %vm894 = vcmask 89120
    %s895 = scalar_lea.vmem [#allocation0], 40
    %896 = vst.msk [vmem:[%s895] sm:$0x1] %vm894, %v893
    %s897 = scalar_lea.vmem %s0, 37
    %v898 = vld [vmem:[%s897] sm:$0x1]
    %899 = vrot.lane.b32.xlu0 %v898, 3
    %v900 = vpop.permute.xlu0 %899
    %vm901 = vcmask 80920
    %s902 = scalar_lea.vmem [#allocation0], 16
    %903 = vst.msk [vmem:[%s902] sm:$0x1] %vm901, %v900
    %s904 = scalar_lea.vmem %s0, 110
    %v905 = vld [vmem:[%s904] sm:$0x1]
    %906 = vrot.lane.b32.xlu0 %v905, 2
    %v907 = vpop.permute.xlu0 %906
    %vm908 = vcmask 72720
    %s909 = scalar_lea.vmem [#allocation0], 48
    %910 = vst.msk [vmem:[%s909] sm:$0x1] %vm908, %v907
    %s911 = scalar_lea.vmem %s0, 55
    %v912 = vld [vmem:[%s911] sm:$0x1]
    %913 = vrot.lane.b32.xlu0 %v912, 1
    %v914 = vpop.permute.xlu0 %913
    %vm915 = vcmask 64520
    %s916 = scalar_lea.vmem [#allocation0], 24
    %917 = vst.msk [vmem:[%s916] sm:$0x1] %vm915, %v914
    %s919 = ssub.s32 2, 1
    %v920 = vld [vmem:[#allocation0] sm:%s919]
    %s922 = ssub.s32 2, 1
    %923 = vst [vmem:[%s1] sm:%s922] %v920
    %s924 = scalar_lea.vmem [#allocation0], 8
    %v925 = vld [vmem:[%s924] sm:%s919]
    %s927 = ssub.s32 2, 1
    %s928 = scalar_lea.vmem %s1, 1
    %929 = vst [vmem:[%s928] sm:%s927] %v925
    %s930 = scalar_lea.vmem [#allocation0], 16
    %v931 = vld [vmem:[%s930] sm:%s919]
    %s933 = ssub.s32 2, 1
    %s934 = scalar_lea.vmem %s1, 2
    %935 = vst [vmem:[%s934] sm:%s933] %v931
    %s936 = scalar_lea.vmem [#allocation0], 24
    %v937 = vld [vmem:[%s936] sm:%s919]
    %s939 = ssub.s32 2, 1
    %s940 = scalar_lea.vmem %s1, 3
    %941 = vst [vmem:[%s940] sm:%s939] %v937
    %s942 = scalar_lea.vmem [#allocation0], 32
    %v943 = vld [vmem:[%s942] sm:%s919]
    %s945 = ssub.s32 2, 1
    %s946 = scalar_lea.vmem %s1, 4
    %947 = vst [vmem:[%s946] sm:%s945] %v943
    %s948 = scalar_lea.vmem [#allocation0], 40
    %v949 = vld [vmem:[%s948] sm:%s919]
    %s951 = ssub.s32 2, 1
    %s952 = scalar_lea.vmem %s1, 5
    %953 = vst [vmem:[%s952] sm:%s951] %v949
    %s954 = scalar_lea.vmem [#allocation0], 48
    %v955 = vld [vmem:[%s954] sm:%s919]
    %s957 = ssub.s32 2, 1
    %s958 = scalar_lea.vmem %s1, 6
    %959 = vst [vmem:[%s958] sm:%s957] %v955

// kernel: single_ccc_loss.1
$region0: #{single_ccc_loss.1}
  #allocation0 [shape = 'u32[]', space=smem, size = 0x4, offset = 0x4, fixed_abs, tag = 'smem constant byte address 0x4 - core index']
  #allocation1 [shape = 'u32[72,128]{1,0:T(1,128)}', space=vmem, size = 0x9000, scoped, tag = 'internal scratch']
  %s0 = inlined_call_operand.vmem [shape: f32[2,896], index: 0, kind: input, shape index: {}]
  %s1 = inlined_call_operand.vmem [shape: f32[32,896], index: 1, kind: input, shape index: {}]
  %s2 = inlined_call_operand.vmem [shape: f32[32,896], index: 2, kind: input, shape index: {}]
  %s3 = inlined_call_operand.vmem [shape: f32[10,8,896], index: 3, kind: output, shape index: {}]
  %s4 = sld [smem:[#allocation0]]
  $region57: #{single_ccc_loss.1} parent=0
    _
  %s6 = ssub.s32 1, %s4
  %s7 = scalar_select 0, %s6, %s4
  loop: start=0, step=1, limit=4
  $region2: #{single_ccc_loss.1} parent=0 // loop_pre_header
    _
  $region3: #{single_ccc_loss.1} parent=0 // loop_header
    %s9 = sphi 0, %s13
    %p10 = scmp.ge.s32.totalorder %s9, 4
    %s16 = sphi 0, %s28
    %s17 = sphi 0, %s24
    %s18 = sphi 0, %s16
    %s19 = sphi 0, %s17
    %s20 = sphi 0, %s18
    %s21 = sphi 0, %s19
    %s29 = sphi 0, %s29
    %s31 = sphi 0, %s29
    %s32 = sphi 0, %s31
    %s46 = sphi 0, %s32
    %s58 = sphi 0, %s60
    %s61 = sphi 0, %s58
    %s62 = sphi 0, %s61
    %s78 = sphi 0, %s62
    %s90 = sphi 0, %s92
    %s93 = sphi 0, %s90
    %s94 = sphi 0, %s93
    %s110 = sphi 0, %s94
    %s116 = sphi 0, %s118
    %s119 = sphi 0, %s116
    %s120 = sphi 0, %s119
    %s136 = sphi 0, %s120
  $region4: #{single_ccc_loss.1} parent=0 // loop_header_branch
    %12 = sbr.rel (%p10) target = $region8
  $region5: #{single_ccc_loss.1} parent=0 // loop_body
    %s14 = ssub.s32 %s9, 1
    %s15 = ssub.s32 %s9, 2
    %s22 = sadd.s32 1, %s17
    %p23 = scmp.ge.s32.totalorder %s22, 1
    %s24 = scalar_select %p23, 0, %s22
    %s25 = sadd.s32 1, %s16
    %s26 = scalar_select %p23, %s25, %s16
    %p27 = scmp.ge.s32.totalorder %s26, 2
    %s28 = scalar_select %p27, 0, %s26
    %s30 = sadd.s32 %s29, 1
    %p33 = scmp.eq.s32.totalorder %s9, 1
    %p34 = scmp.ne.s32.totalorder %s29, %s31
    %p35 = scmp.eq.s32.totalorder %s9, 0
    %p36 = por %p34, %p35
    %p37 = scmp.ne.s32.totalorder %s29, %s31
    %p38 = scmp.eq.s32.totalorder %s14, 1
    %p39 = por %p37, %p38
    %p40 = scmp.ne.s32.totalorder %s31, %s32
    %p41 = scmp.eq.s32.totalorder %s14, 0
    %p42 = por %p40, %p41
    %p43 = scmp.ne.s32.totalorder %s31, %s32
    %p44 = scmp.eq.s32.totalorder %s15, 1
    %p45 = por %p43, %p44
    %p47 = scmp.ne.s32.totalorder %s32, %s46
    %p48 = scmp.eq.s32.totalorder %s15, 0
    %p49 = por %p47, %p48
    %s50 = sadd.s32 %s16, %s17
    %p51 = scmp.lt.s32.totalorder %s50, 0
    %s52 = scalar_select %p51, %s50, 0
    %s53 = sadd.s32 %s28, %s24
    %p54 = scmp.lt.s32.totalorder %s53, 0
    %s55 = scalar_select %p54, %s53, 0
    %s56 = ssub.s32 %s52, %s55
    %p57 = scmp.eq.s32.totalorder %s56, 0
    %s59 = sadd.s32 %s58, 1
    %s60 = scalar_select %p57, %s58, %s59
    %p63 = pneg %p57
    %p64 = scmp.eq.s32.totalorder %s9, 1
    %p65 = por %p63, %p64
    %p66 = scmp.ne.s32.totalorder %s58, %s61
    %p67 = scmp.eq.s32.totalorder %s9, 0
    %p68 = por %p66, %p67
    %p69 = scmp.ne.s32.totalorder %s58, %s61
    %p70 = scmp.eq.s32.totalorder %s14, 1
    %p71 = por %p69, %p70
    %p72 = scmp.ne.s32.totalorder %s61, %s62
    %p73 = scmp.eq.s32.totalorder %s14, 0
    %p74 = por %p72, %p73
    %p75 = scmp.ne.s32.totalorder %s61, %s62
    %p76 = scmp.eq.s32.totalorder %s15, 1
    %p77 = por %p75, %p76
    %p79 = scmp.ne.s32.totalorder %s62, %s78
    %p80 = scmp.eq.s32.totalorder %s15, 0
    %p81 = por %p79, %p80
    %s82 = sadd.s32 %s16, %s17
    %p83 = scmp.lt.s32.totalorder %s82, 0
    %s84 = scalar_select %p83, %s82, 0
    %s85 = sadd.s32 %s28, %s24
    %p86 = scmp.lt.s32.totalorder %s85, 0
    %s87 = scalar_select %p86, %s85, 0
    %s88 = ssub.s32 %s84, %s87
    %p89 = scmp.eq.s32.totalorder %s88, 0
    %s91 = sadd.s32 %s90, 1
    %s92 = scalar_select %p89, %s90, %s91
    %p95 = pneg %p89
    %p96 = scmp.eq.s32.totalorder %s9, 1
    %p97 = por %p95, %p96
    %p98 = scmp.ne.s32.totalorder %s90, %s93
    %p99 = scmp.eq.s32.totalorder %s9, 0
    %p100 = por %p98, %p99
    %p101 = scmp.ne.s32.totalorder %s90, %s93
    %p102 = scmp.eq.s32.totalorder %s14, 1
    %p103 = por %p101, %p102
    %p104 = scmp.ne.s32.totalorder %s93, %s94
    %p105 = scmp.eq.s32.totalorder %s14, 0
    %p106 = por %p104, %p105
    %p107 = scmp.ne.s32.totalorder %s93, %s94
    %p108 = scmp.eq.s32.totalorder %s15, 1
    %p109 = por %p107, %p108
    %p111 = scmp.ne.s32.totalorder %s94, %s110
    %p112 = scmp.eq.s32.totalorder %s15, 0
    %p113 = por %p111, %p112
    %s114 = ssub.s32 %s16, %s28
    %p115 = scmp.eq.s32.totalorder %s114, 0
    %s117 = sadd.s32 %s116, 1
    %s118 = scalar_select %p115, %s116, %s117
    %p121 = pneg %p115
    %p122 = scmp.eq.s32.totalorder %s9, 1
    %p123 = por %p121, %p122
    %p124 = scmp.ne.s32.totalorder %s116, %s119
    %p125 = scmp.eq.s32.totalorder %s9, 0
    %p126 = por %p124, %p125
    %p127 = scmp.ne.s32.totalorder %s116, %s119
    %p128 = scmp.eq.s32.totalorder %s14, 1
    %p129 = por %p127, %p128
    %p130 = scmp.ne.s32.totalorder %s119, %s120
    %p131 = scmp.eq.s32.totalorder %s14, 0
    %p132 = por %p130, %p131
    %p133 = scmp.ne.s32.totalorder %s119, %s120
    %p134 = scmp.eq.s32.totalorder %s15, 1
    %p135 = por %p133, %p134
    %p137 = scmp.ne.s32.totalorder %s120, %s136
    %p138 = scmp.eq.s32.totalorder %s15, 0
    %p139 = por %p137, %p138
    %p140 = scmp.le.s32.totalorder 1, %s9
    %p141 = scmp.lt.s32.totalorder %s9, 3
    %p142 = pnand %p140, %p141
    %p143 = pneg %p142
    // Predicated region
    $region9: #{single_ccc_loss.1} parent=5 // pred_check
      _
    $region10: #{single_ccc_loss.1} parent=5 // pred_check_branch
      %145 = sbr.rel (%p142) target = $region12
    $region11: #{single_ccc_loss.1} parent=5 // pred_region
      %s146 = ssub.s32 %s9, 1
      // Predicated region
      $region13: #{single_ccc_loss.1} parent=11 // pred_check
        %p147 = pneg %p42
      $region14: #{single_ccc_loss.1} parent=11 // pred_check_branch
        %149 = sbr.rel (%p147) target = $region16
      $region15: #{single_ccc_loss.1} parent=11 // pred_region
        _
      $region16: #{single_ccc_loss.1} parent=11 // pred_fallthru
        _
    $region12: #{single_ccc_loss.1} parent=5 // pred_fallthru
      _
    %p150 = scmp.lt.s32.totalorder %s9, 2
    // Predicated region
    $region17: #{single_ccc_loss.1} parent=5 // pred_check
      %p151 = pneg %p150
    $region18: #{single_ccc_loss.1} parent=5 // pred_check_branch
      %153 = sbr.rel (%p151) target = $region20
    $region19: #{single_ccc_loss.1} parent=5 // pred_region
      // Predicated region
      $region21: #{single_ccc_loss.1} parent=19 // pred_check
        %p154 = pneg %p68
      $region22: #{single_ccc_loss.1} parent=19 // pred_check_branch
        %156 = sbr.rel (%p154) target = $region24
      $region23: #{single_ccc_loss.1} parent=19 // pred_region
        %s157 = sadd.s32 %s16, %s17
        %p158 = scmp.lt.s32.totalorder %s157, 0
        %s159 = scalar_select %p158, %s157, 0
        %s160 = smul.u32 4, %s159
        %p161 = scmp.lt.s32.totalorder %s160, 3
        %s162 = scalar_select %p161, %s160, 3
        %s163 = smul.addr %s162, 7
        %s164 = smul.addr %s163, 8
        %s165 = scalar_lea.vmem %s1, %s164
        %s166 = sadd.s32 %s16, %s17
        %p167 = scmp.lt.s32.totalorder %s166, 0
        %s168 = scalar_select %p167, %s166, 0
        %s169 = smul.u32 4, %s168
      $region24: #{single_ccc_loss.1} parent=19 // pred_fallthru
        _
      // Predicated region
      $region25: #{single_ccc_loss.1} parent=19 // pred_check
        %p170 = pneg %p100
      $region26: #{single_ccc_loss.1} parent=19 // pred_check_branch
        %172 = sbr.rel (%p170) target = $region28
      $region27: #{single_ccc_loss.1} parent=19 // pred_region
        %s173 = sadd.s32 %s16, %s17
        %p174 = scmp.lt.s32.totalorder %s173, 0
        %s175 = scalar_select %p174, %s173, 0
        %s176 = smul.u32 4, %s175
        %p177 = scmp.lt.s32.totalorder %s176, 3
        %s178 = scalar_select %p177, %s176, 3
        %s179 = smul.addr %s178, 7
        %s180 = smul.addr %s179, 8
        %s181 = scalar_lea.vmem %s2, %s180
        %s182 = sadd.s32 %s16, %s17
        %p183 = scmp.lt.s32.totalorder %s182, 0
        %s184 = scalar_select %p183, %s182, 0
        %s185 = smul.u32 4, %s184
      $region28: #{single_ccc_loss.1} parent=19 // pred_fallthru
        _
    $region20: #{single_ccc_loss.1} parent=5 // pred_fallthru
      _
    %p186 = scmp.le.s32.totalorder 1, %s9
    %p187 = scmp.lt.s32.totalorder %s9, 3
    %p188 = pnand %p186, %p187
    %p189 = pneg %p188
    // Predicated region
    $region29: #{single_ccc_loss.1} parent=5 // pred_check
      _
    $region30: #{single_ccc_loss.1} parent=5 // pred_check_branch
      %191 = sbr.rel (%p188) target = $region32
    $region31: #{single_ccc_loss.1} parent=5 // pred_region
      %s192 = ssub.s32 %s9, 1
      %p193 = pneg %p42
      %p194 = pneg %p39
      %s195 = sadd.s32 %s18, %s19
      %p196 = scmp.lt.s32.totalorder %s195, 0
      %s197 = scalar_select %p196, %s195, 0
      %s198 = smul.u32 4, %s197
      %p199 = scmp.lt.s32.totalorder %s198, 3
      %s200 = scalar_select %p199, %s198, 3
      %s201 = smul.addr %s200, 7
      %s202 = smul.addr %s201, 8
      %s203 = scalar_lea.vmem %s1, %s202
      %p204 = pneg %p74
      %p205 = pneg %p71
      %s206 = sadd.s32 %s18, %s19
      %p207 = scmp.lt.s32.totalorder %s206, 0
      %s208 = scalar_select %p207, %s206, 0
      %s209 = smul.u32 4, %s208
      %p210 = scmp.lt.s32.totalorder %s209, 3
      %s211 = scalar_select %p210, %s209, 3
      %s212 = smul.addr %s211, 7
      %s213 = smul.addr %s212, 8
      %s214 = scalar_lea.vmem %s2, %s213
      %p215 = pneg %p106
      %p216 = pneg %p103
      %p217 = pneg %p132
      %p218 = pneg %p129
      %s219 = smul.u32 5, %s18
      %p220 = scmp.lt.s32.totalorder %s219, 9
      %s221 = scalar_select %p220, %s219, 9
      %s222 = smul.addr %s221, 7
      %s223 = smul.addr %s222, 8
      %s224 = scalar_lea.vmem %s3, %s223
      %s225 = sadd.s32 %s18, %s19
      %p226 = scmp.lt.s32.totalorder %s225, 0
      %s227 = scalar_select %p226, %s225, 0
      %s228 = smul.u32 4, %s227
      %p229 = scmp.lt.s32.totalorder %s228, 3
      %s230 = scalar_select %p229, %s228, 3
      %s231 = smul.addr %s230, 7
      %s232 = smul.addr %s231, 8
      %s233 = scalar_lea.vmem %s1, %s232
      %s234 = sadd.s32 %s18, %s19
      %p235 = scmp.lt.s32.totalorder %s234, 0
      %s236 = scalar_select %p235, %s234, 0
      %s237 = smul.u32 4, %s236
      %s238 = sadd.s32 %s18, %s19
      %p239 = scmp.lt.s32.totalorder %s238, 0
      %s240 = scalar_select %p239, %s238, 0
      %s241 = smul.u32 4, %s240
      %p242 = scmp.lt.s32.totalorder %s241, 3
      %s243 = scalar_select %p242, %s241, 3
      %s244 = smul.addr %s243, 7
      %s245 = smul.addr %s244, 8
      %s246 = scalar_lea.vmem %s2, %s245
      %s247 = sadd.s32 %s18, %s19
      %p248 = scmp.lt.s32.totalorder %s247, 0
      %s249 = scalar_select %p248, %s247, 0
      %s250 = smul.u32 4, %s249
      %s251 = smul.u32 5, %s18
      %p252 = scmp.lt.s32.totalorder %s251, 9
      %s253 = scalar_select %p252, %s251, 9
      %s254 = smul.addr %s253, 7
      %s255 = smul.addr %s254, 8
      %s256 = scalar_lea.vmem %s3, %s255
      %s257 = smul.u32 5, %s18
      %p258 = scmp.eq.s32.totalorder %s19, 0
      // Predicated region
      $region33: #{single_ccc_loss.1} parent=31 // pred_check
        %p259 = pneg %p258
      $region34: #{single_ccc_loss.1} parent=31 // pred_check_branch
        %261 = sbr.rel (%p259) target = $region36
      $region35: #{single_ccc_loss.1} parent=31 // pred_region
        %262 = vst [vmem:[%s256] sm:$0xff] 0.0
        %263 = vst [vmem:[%s256 + $0x8] sm:$0xff] 0.0
        %264 = vst [vmem:[%s256 + $0x10] sm:$0xff] 0.0
        %265 = vst [vmem:[%s256 + $0x18] sm:$0xff] 0.0
        %266 = vst [vmem:[%s256 + $0x20] sm:$0xff] 0.0
        %267 = vst [vmem:[%s256 + $0x28] sm:$0xff] 0.0
        %268 = vst [vmem:[%s256 + $0x30] sm:$0xff] 0.0
        %269 = vst [vmem:[%s256 + $0x38] sm:$0xff] 0.0
        %270 = vst [vmem:[%s256 + $0x40] sm:$0xff] 0.0
        %271 = vst [vmem:[%s256 + $0x48] sm:$0xff] 0.0
        %272 = vst [vmem:[%s256 + $0x50] sm:$0xff] 0.0
        %273 = vst [vmem:[%s256 + $0x58] sm:$0xff] 0.0
        %274 = vst [vmem:[%s256 + $0x60] sm:$0xff] 0.0
        %275 = vst [vmem:[%s256 + $0x68] sm:$0xff] 0.0
        %276 = vst [vmem:[%s256 + $0x70] sm:$0xff] 0.0
        %277 = vst [vmem:[%s256 + $0x78] sm:$0xff] 0.0
        %278 = vst [vmem:[%s256 + $0x80] sm:$0xff] 0.0
        %279 = vst [vmem:[%s256 + $0x88] sm:$0xff] 0.0
        %280 = vst [vmem:[%s256 + $0x90] sm:$0xff] 0.0
        %281 = vst [vmem:[%s256 + $0x98] sm:$0xff] 0.0
        %282 = vst [vmem:[%s256 + $0xa0] sm:$0xff] 0.0
        %283 = vst [vmem:[%s256 + $0xa8] sm:$0xff] 0.0
        %284 = vst [vmem:[%s256 + $0xb0] sm:$0xff] 0.0
        %285 = vst [vmem:[%s256 + $0xb8] sm:$0xff] 0.0
        %286 = vst [vmem:[%s256 + $0xc0] sm:$0xff] 0.0
        %287 = vst [vmem:[%s256 + $0xc8] sm:$0xff] 0.0
        %288 = vst [vmem:[%s256 + $0xd0] sm:$0xff] 0.0
        %289 = vst [vmem:[%s256 + $0xd8] sm:$0xff] 0.0
        %290 = vst [vmem:[%s256 + $0xe0] sm:$0xff] 0.0
        %291 = vst [vmem:[%s256 + $0xe8] sm:$0xff] 0.0
        %292 = vst [vmem:[%s256 + $0xf0] sm:$0xff] 0.0
        %293 = vst [vmem:[%s256 + $0xf8] sm:$0xff] 0.0
        %294 = vst [vmem:[%s256 + $0x100] sm:$0xff] 0.0
        %295 = vst [vmem:[%s256 + $0x108] sm:$0xff] 0.0
        %296 = vst [vmem:[%s256 + $0x110] sm:$0xff] 0.0
      $region36: #{single_ccc_loss.1} parent=31 // pred_fallthru
        _
      %s297 = sadd.s32 %s18, %s19
      %s298 = smul.u32 %s297, 32
      %s299 = ssub.s32 32, %s298
      %v300 = vld [vmem:[%s233] sm:$0xff]
      %v301 = vld [vmem:[%s233 + $0x8] sm:$0xff]
      %v302 = vld [vmem:[%s233 + $0x10] sm:$0xff]
      %v303 = vld [vmem:[%s233 + $0x18] sm:$0xff]
      %v304 = vld [vmem:[%s233 + $0x20] sm:$0xff]
      %v305 = vld [vmem:[%s233 + $0x28] sm:$0xff]
      %v306 = vld [vmem:[%s233 + $0x30] sm:$0xff]
      %v307 = vld [vmem:[%s233 + $0x38] sm:$0xff]
      %v308 = vld [vmem:[%s233 + $0x40] sm:$0xff]
      %v309 = vld [vmem:[%s233 + $0x48] sm:$0xff]
      %v310 = vld [vmem:[%s233 + $0x50] sm:$0xff]
      %v311 = vld [vmem:[%s233 + $0x58] sm:$0xff]
      %v312 = vld [vmem:[%s233 + $0x60] sm:$0xff]
      %v313 = vld [vmem:[%s233 + $0x68] sm:$0xff]
      %v314 = vld [vmem:[%s233 + $0x70] sm:$0xff]
      %v315 = vld [vmem:[%s233 + $0x78] sm:$0xff]
      %v316 = vld [vmem:[%s233 + $0x80] sm:$0xff]
      %v317 = vld [vmem:[%s233 + $0x88] sm:$0xff]
      %v318 = vld [vmem:[%s233 + $0x90] sm:$0xff]
      %v319 = vld [vmem:[%s233 + $0x98] sm:$0xff]
      %v320 = vld [vmem:[%s233 + $0xa0] sm:$0xff]
      %v321 = vld [vmem:[%s233 + $0xa8] sm:$0xff]
      %v322 = vld [vmem:[%s233 + $0xb0] sm:$0xff]
      %v323 = vld [vmem:[%s233 + $0xb8] sm:$0xff]
      %v324 = vld [vmem:[%s233 + $0xc0] sm:$0xff]
      %v325 = vld [vmem:[%s233 + $0xc8] sm:$0xff]
      %v326 = vld [vmem:[%s233 + $0xd0] sm:$0xff]
      %v327 = vld [vmem:[%s233 + $0xd8] sm:$0xff]
      %v328 = vld [vmem:[%s0] ss:$2 sm:$0xff]
      %v330 = vperm.slane %v328, 0
      %v331 = vperm.slane %v328, 1
      %v332 = vperm.slane %v328, 2
      %v333 = vperm.slane %v328, 3
      %v334 = vperm.slane %v328, 4
      %v335 = vperm.slane %v328, 5
      %v336 = vperm.slane %v328, 6
      %v344 = vsub.f32 %v300, %v330
      %v345 = vsub.f32 %v301, %v331
      %v346 = vsub.f32 %v302, %v332
      %v347 = vsub.f32 %v303, %v333
      %v348 = vsub.f32 %v304, %v334
      %v349 = vsub.f32 %v305, %v335
      %v350 = vsub.f32 %v306, %v336
      %v351 = vsub.f32 %v307, %v330
      %v352 = vsub.f32 %v308, %v331
      %v353 = vsub.f32 %v309, %v332
      %v354 = vsub.f32 %v310, %v333
      %v355 = vsub.f32 %v311, %v334
      %v356 = vsub.f32 %v312, %v335
      %v357 = vsub.f32 %v313, %v336
      %v358 = vsub.f32 %v314, %v330
      %v359 = vsub.f32 %v315, %v331
      %v360 = vsub.f32 %v316, %v332
      %v361 = vsub.f32 %v317, %v333
      %v362 = vsub.f32 %v318, %v334
      %v363 = vsub.f32 %v319, %v335
      %v364 = vsub.f32 %v320, %v336
      %v365 = vsub.f32 %v321, %v330
      %v366 = vsub.f32 %v322, %v331
      %v367 = vsub.f32 %v323, %v332
      %v368 = vsub.f32 %v324, %v333
      %v369 = vsub.f32 %v325, %v334
      %v370 = vsub.f32 %v326, %v335
      %v371 = vsub.f32 %v327, %v336
      %v372 = vld [vmem:[%s246] sm:$0xff]
      %v373 = vld [vmem:[%s246 + $0x8] sm:$0xff]
      %v374 = vld [vmem:[%s246 + $0x10] sm:$0xff]
      %v375 = vld [vmem:[%s246 + $0x18] sm:$0xff]
      %v376 = vld [vmem:[%s246 + $0x20] sm:$0xff]
      %v377 = vld [vmem:[%s246 + $0x28] sm:$0xff]
      %v378 = vld [vmem:[%s246 + $0x30] sm:$0xff]
      %v379 = vld [vmem:[%s246 + $0x38] sm:$0xff]
      %v380 = vld [vmem:[%s246 + $0x40] sm:$0xff]
      %v381 = vld [vmem:[%s246 + $0x48] sm:$0xff]
      %v382 = vld [vmem:[%s246 + $0x50] sm:$0xff]
      %v383 = vld [vmem:[%s246 + $0x58] sm:$0xff]
      %v384 = vld [vmem:[%s246 + $0x60] sm:$0xff]
      %v385 = vld [vmem:[%s246 + $0x68] sm:$0xff]
      %v386 = vld [vmem:[%s246 + $0x70] sm:$0xff]
      %v387 = vld [vmem:[%s246 + $0x78] sm:$0xff]
      %v388 = vld [vmem:[%s246 + $0x80] sm:$0xff]
      %v389 = vld [vmem:[%s246 + $0x88] sm:$0xff]
      %v390 = vld [vmem:[%s246 + $0x90] sm:$0xff]
      %v391 = vld [vmem:[%s246 + $0x98] sm:$0xff]
      %v392 = vld [vmem:[%s246 + $0xa0] sm:$0xff]
      %v393 = vld [vmem:[%s246 + $0xa8] sm:$0xff]
      %v394 = vld [vmem:[%s246 + $0xb0] sm:$0xff]
      %v395 = vld [vmem:[%s246 + $0xb8] sm:$0xff]
      %v396 = vld [vmem:[%s246 + $0xc0] sm:$0xff]
      %v397 = vld [vmem:[%s246 + $0xc8] sm:$0xff]
      %v398 = vld [vmem:[%s246 + $0xd0] sm:$0xff]
      %v399 = vld [vmem:[%s246 + $0xd8] sm:$0xff]
      %s400 = scalar_lea.vmem %s0, 1
      %v401 = vld [vmem:[%s400] ss:$2 sm:$0xff]
      %v403 = vperm.slane %v401, 0
      %v404 = vperm.slane %v401, 1
      %v405 = vperm.slane %v401, 2
      %v406 = vperm.slane %v401, 3
      %v407 = vperm.slane %v401, 4
      %v408 = vperm.slane %v401, 5
      %v409 = vperm.slane %v401, 6
      %v417 = vsub.f32 %v372, %v403
      %v418 = vsub.f32 %v373, %v404
      %v419 = vsub.f32 %v374, %v405
      %v420 = vsub.f32 %v375, %v406
      %v421 = vsub.f32 %v376, %v407
      %v422 = vsub.f32 %v377, %v408
      %v423 = vsub.f32 %v378, %v409
      %v424 = vsub.f32 %v379, %v403
      %v425 = vsub.f32 %v380, %v404
      %v426 = vsub.f32 %v381, %v405
      %v427 = vsub.f32 %v382, %v406
      %v428 = vsub.f32 %v383, %v407
      %v429 = vsub.f32 %v384, %v408
      %v430 = vsub.f32 %v385, %v409
      %v431 = vsub.f32 %v386, %v403
      %v432 = vsub.f32 %v387, %v404
      %v433 = vsub.f32 %v388, %v405
      %v434 = vsub.f32 %v389, %v406
      %v435 = vsub.f32 %v390, %v407
      %v436 = vsub.f32 %v391, %v408
      %v437 = vsub.f32 %v392, %v409
      %v438 = vsub.f32 %v393, %v403
      %v439 = vsub.f32 %v394, %v404
      %v440 = vsub.f32 %v395, %v405
      %v441 = vsub.f32 %v396, %v406
      %v442 = vsub.f32 %v397, %v407
      %v443 = vsub.f32 %v398, %v408
      %v444 = vsub.f32 %v399, %v409
      %p445 = scmp.ge.s32.totalorder %s299, 32
      // Predicated region
      $region37: #{single_ccc_loss.1} parent=31 // pred_check
        %p446 = pneg %p445
      $region38: #{single_ccc_loss.1} parent=31 // pred_check_branch
        %448 = sbr.rel (%p446) target = $region40
      $region39: #{single_ccc_loss.1} parent=31 // pred_region
        %v449 = vld [vmem:[%s256] sm:$0xff]
        %v450 = vld [vmem:[%s256 + $0x8] sm:$0xff]
        %v451 = vld [vmem:[%s256 + $0x10] sm:$0xff]
        %v452 = vld [vmem:[%s256 + $0x18] sm:$0xff]
        %v453 = vld [vmem:[%s256 + $0x20] sm:$0xff]
        %v454 = vld [vmem:[%s256 + $0x28] sm:$0xff]
        %v455 = vld [vmem:[%s256 + $0x30] sm:$0xff]
        %v456 = vadd.f32 %v344, %v351
        %v457 = vadd.f32 %v456, %v358
        %v458 = vadd.f32 %v457, %v365
        %v459 = vadd.f32 %v345, %v352
        %v460 = vadd.f32 %v459, %v359
        %v461 = vadd.f32 %v460, %v366
        %v462 = vadd.f32 %v346, %v353
        %v463 = vadd.f32 %v462, %v360
        %v464 = vadd.f32 %v463, %v367
        %v465 = vadd.f32 %v347, %v354
        %v466 = vadd.f32 %v465, %v361
        %v467 = vadd.f32 %v466, %v368
        %v468 = vadd.f32 %v348, %v355
        %v469 = vadd.f32 %v468, %v362
        %v470 = vadd.f32 %v469, %v369
        %v471 = vadd.f32 %v349, %v356
        %v472 = vadd.f32 %v471, %v363
        %v473 = vadd.f32 %v472, %v370
        %v474 = vadd.f32 %v350, %v357
        %v475 = vadd.f32 %v474, %v364
        %v476 = vadd.f32 %v475, %v371
        %v477 = vadd.f32 %v449, %v458
        %v478 = vadd.f32 %v450, %v461
        %v479 = vadd.f32 %v451, %v464
        %v480 = vadd.f32 %v452, %v467
        %v481 = vadd.f32 %v453, %v470
        %v482 = vadd.f32 %v454, %v473
        %v483 = vadd.f32 %v455, %v476
        %484 = vst [vmem:[%s256] sm:$0xff] %v477
        %485 = vst [vmem:[%s256 + $0x8] sm:$0xff] %v478
        %486 = vst [vmem:[%s256 + $0x10] sm:$0xff] %v479
        %487 = vst [vmem:[%s256 + $0x18] sm:$0xff] %v480
        %488 = vst [vmem:[%s256 + $0x20] sm:$0xff] %v481
        %489 = vst [vmem:[%s256 + $0x28] sm:$0xff] %v482
        %490 = vst [vmem:[%s256 + $0x30] sm:$0xff] %v483
        %s491 = scalar_lea.vmem %s256, 56
        %v492 = vld [vmem:[%s491] sm:$0xff]
        %v493 = vld [vmem:[%s491 + $0x8] sm:$0xff]
        %v494 = vld [vmem:[%s491 + $0x10] sm:$0xff]
        %v495 = vld [vmem:[%s491 + $0x18] sm:$0xff]
        %v496 = vld [vmem:[%s491 + $0x20] sm:$0xff]
        %v497 = vld [vmem:[%s491 + $0x28] sm:$0xff]
        %v498 = vld [vmem:[%s491 + $0x30] sm:$0xff]
        %v499 = vadd.f32 %v417, %v424
        %v500 = vadd.f32 %v499, %v431
        %v501 = vadd.f32 %v500, %v438
        %v502 = vadd.f32 %v418, %v425
        %v503 = vadd.f32 %v502, %v432
        %v504 = vadd.f32 %v503, %v439
        %v505 = vadd.f32 %v419, %v426
        %v506 = vadd.f32 %v505, %v433
        %v507 = vadd.f32 %v506, %v440
        %v508 = vadd.f32 %v420, %v427
        %v509 = vadd.f32 %v508, %v434
        %v510 = vadd.f32 %v509, %v441
        %v511 = vadd.f32 %v421, %v428
        %v512 = vadd.f32 %v511, %v435
        %v513 = vadd.f32 %v512, %v442
        %v514 = vadd.f32 %v422, %v429
        %v515 = vadd.f32 %v514, %v436
        %v516 = vadd.f32 %v515, %v443
        %v517 = vadd.f32 %v423, %v430
        %v518 = vadd.f32 %v517, %v437
        %v519 = vadd.f32 %v518, %v444
        %v520 = vadd.f32 %v492, %v501
        %v521 = vadd.f32 %v493, %v504
        %v522 = vadd.f32 %v494, %v507
        %v523 = vadd.f32 %v495, %v510
        %v524 = vadd.f32 %v496, %v513
        %v525 = vadd.f32 %v497, %v516
        %v526 = vadd.f32 %v498, %v519
        %527 = vst [vmem:[%s491] sm:$0xff] %v520
        %528 = vst [vmem:[%s491 + $0x8] sm:$0xff] %v521
        %529 = vst [vmem:[%s491 + $0x10] sm:$0xff] %v522
        %530 = vst [vmem:[%s491 + $0x18] sm:$0xff] %v523
        %531 = vst [vmem:[%s491 + $0x20] sm:$0xff] %v524
        %532 = vst [vmem:[%s491 + $0x28] sm:$0xff] %v525
        %533 = vst [vmem:[%s491 + $0x30] sm:$0xff] %v526
        %s534 = scalar_lea.vmem %s256, 112
        %v535 = vld [vmem:[%s534] sm:$0xff]
        %v536 = vld [vmem:[%s534 + $0x8] sm:$0xff]
        %v537 = vld [vmem:[%s534 + $0x10] sm:$0xff]
        %v538 = vld [vmem:[%s534 + $0x18] sm:$0xff]
        %v539 = vld [vmem:[%s534 + $0x20] sm:$0xff]
        %v540 = vld [vmem:[%s534 + $0x28] sm:$0xff]
        %v541 = vld [vmem:[%s534 + $0x30] sm:$0xff]
        %v542 = vmul.f32 %v344, %v344
        %v543 = vmul.f32 %v345, %v345
        %v544 = vmul.f32 %v346, %v346
        %v545 = vmul.f32 %v347, %v347
        %v546 = vmul.f32 %v348, %v348
        %v547 = vmul.f32 %v349, %v349
        %v548 = vmul.f32 %v350, %v350
        %v549 = vmul.f32 %v351, %v351
        %v550 = vmul.f32 %v352, %v352
        %v551 = vmul.f32 %v353, %v353
        %v552 = vmul.f32 %v354, %v354
        %v553 = vmul.f32 %v355, %v355
        %v554 = vmul.f32 %v356, %v356
        %v555 = vmul.f32 %v357, %v357
        %v556 = vmul.f32 %v358, %v358
        %v557 = vmul.f32 %v359, %v359
        %v558 = vmul.f32 %v360, %v360
        %v559 = vmul.f32 %v361, %v361
        %v560 = vmul.f32 %v362, %v362
        %v561 = vmul.f32 %v363, %v363
        %v562 = vmul.f32 %v364, %v364
        %v563 = vmul.f32 %v365, %v365
        %v564 = vmul.f32 %v366, %v366
        %v565 = vmul.f32 %v367, %v367
        %v566 = vmul.f32 %v368, %v368
        %v567 = vmul.f32 %v369, %v369
        %v568 = vmul.f32 %v370, %v370
        %v569 = vmul.f32 %v371, %v371
        %v570 = vadd.f32 %v542, %v549
        %v571 = vadd.f32 %v570, %v556
        %v572 = vadd.f32 %v571, %v563
        %v573 = vadd.f32 %v543, %v550
        %v574 = vadd.f32 %v573, %v557
        %v575 = vadd.f32 %v574, %v564
        %v576 = vadd.f32 %v544, %v551
        %v577 = vadd.f32 %v576, %v558
        %v578 = vadd.f32 %v577, %v565
        %v579 = vadd.f32 %v545, %v552
        %v580 = vadd.f32 %v579, %v559
        %v581 = vadd.f32 %v580, %v566
        %v582 = vadd.f32 %v546, %v553
        %v583 = vadd.f32 %v582, %v560
        %v584 = vadd.f32 %v583, %v567
        %v585 = vadd.f32 %v547, %v554
        %v586 = vadd.f32 %v585, %v561
        %v587 = vadd.f32 %v586, %v568
        %v588 = vadd.f32 %v548, %v555
        %v589 = vadd.f32 %v588, %v562
        %v590 = vadd.f32 %v589, %v569
        %v591 = vadd.f32 %v535, %v572
        %v592 = vadd.f32 %v536, %v575
        %v593 = vadd.f32 %v537, %v578
        %v594 = vadd.f32 %v538, %v581
        %v595 = vadd.f32 %v539, %v584
        %v596 = vadd.f32 %v540, %v587
        %v597 = vadd.f32 %v541, %v590
        %598 = vst [vmem:[%s534] sm:$0xff] %v591
        %599 = vst [vmem:[%s534 + $0x8] sm:$0xff] %v592
        %600 = vst [vmem:[%s534 + $0x10] sm:$0xff] %v593
        %601 = vst [vmem:[%s534 + $0x18] sm:$0xff] %v594
        %602 = vst [vmem:[%s534 + $0x20] sm:$0xff] %v595
        %603 = vst [vmem:[%s534 + $0x28] sm:$0xff] %v596
        %604 = vst [vmem:[%s534 + $0x30] sm:$0xff] %v597
        %s605 = scalar_lea.vmem %s256, 168
        %v606 = vld [vmem:[%s605] sm:$0xff]
        %v607 = vld [vmem:[%s605 + $0x8] sm:$0xff]
        %v608 = vld [vmem:[%s605 + $0x10] sm:$0xff]
        %v609 = vld [vmem:[%s605 + $0x18] sm:$0xff]
        %v610 = vld [vmem:[%s605 + $0x20] sm:$0xff]
        %v611 = vld [vmem:[%s605 + $0x28] sm:$0xff]
        %v612 = vld [vmem:[%s605 + $0x30] sm:$0xff]
        %v613 = vmul.f32 %v417, %v417
        %v614 = vmul.f32 %v418, %v418
        %v615 = vmul.f32 %v419, %v419
        %v616 = vmul.f32 %v420, %v420
        %v617 = vmul.f32 %v421, %v421
        %v618 = vmul.f32 %v422, %v422
        %v619 = vmul.f32 %v423, %v423
        %v620 = vmul.f32 %v424, %v424
        %v621 = vmul.f32 %v425, %v425
        %v622 = vmul.f32 %v426, %v426
        %v623 = vmul.f32 %v427, %v427
        %v624 = vmul.f32 %v428, %v428
        %v625 = vmul.f32 %v429, %v429
        %v626 = vmul.f32 %v430, %v430
        %v627 = vmul.f32 %v431, %v431
        %v628 = vmul.f32 %v432, %v432
        %v629 = vmul.f32 %v433, %v433
        %v630 = vmul.f32 %v434, %v434
        %v631 = vmul.f32 %v435, %v435
        %v632 = vmul.f32 %v436, %v436
        %v633 = vmul.f32 %v437, %v437
        %v634 = vmul.f32 %v438, %v438
        %v635 = vmul.f32 %v439, %v439
        %v636 = vmul.f32 %v440, %v440
        %v637 = vmul.f32 %v441, %v441
        %v638 = vmul.f32 %v442, %v442
        %v639 = vmul.f32 %v443, %v443
        %v640 = vmul.f32 %v444, %v444
        %v641 = vadd.f32 %v613, %v620
        %v642 = vadd.f32 %v641, %v627
        %v643 = vadd.f32 %v642, %v634
        %v644 = vadd.f32 %v614, %v621
        %v645 = vadd.f32 %v644, %v628
        %v646 = vadd.f32 %v645, %v635
        %v647 = vadd.f32 %v615, %v622
        %v648 = vadd.f32 %v647, %v629
        %v649 = vadd.f32 %v648, %v636
        %v650 = vadd.f32 %v616, %v623
        %v651 = vadd.f32 %v650, %v630
        %v652 = vadd.f32 %v651, %v637
        %v653 = vadd.f32 %v617, %v624
        %v654 = vadd.f32 %v653, %v631
        %v655 = vadd.f32 %v654, %v638
        %v656 = vadd.f32 %v618, %v625
        %v657 = vadd.f32 %v656, %v632
        %v658 = vadd.f32 %v657, %v639
        %v659 = vadd.f32 %v619, %v626
        %v660 = vadd.f32 %v659, %v633
        %v661 = vadd.f32 %v660, %v640
        %v662 = vadd.f32 %v606, %v643
        %v663 = vadd.f32 %v607, %v646
        %v664 = vadd.f32 %v608, %v649
        %v665 = vadd.f32 %v609, %v652
        %v666 = vadd.f32 %v610, %v655
        %v667 = vadd.f32 %v611, %v658
        %v668 = vadd.f32 %v612, %v661
        %669 = vst [vmem:[%s605] sm:$0xff] %v662
        %670 = vst [vmem:[%s605 + $0x8] sm:$0xff] %v663
        %671 = vst [vmem:[%s605 + $0x10] sm:$0xff] %v664
        %672 = vst [vmem:[%s605 + $0x18] sm:$0xff] %v665
        %673 = vst [vmem:[%s605 + $0x20] sm:$0xff] %v666
        %674 = vst [vmem:[%s605 + $0x28] sm:$0xff] %v667
        %675 = vst [vmem:[%s605 + $0x30] sm:$0xff] %v668
        %s676 = scalar_lea.vmem %s256, 224
        %v677 = vld [vmem:[%s676] sm:$0xff]
        %v678 = vld [vmem:[%s676 + $0x8] sm:$0xff]
        %v679 = vld [vmem:[%s676 + $0x10] sm:$0xff]
        %v680 = vld [vmem:[%s676 + $0x18] sm:$0xff]
        %v681 = vld [vmem:[%s676 + $0x20] sm:$0xff]
        %v682 = vld [vmem:[%s676 + $0x28] sm:$0xff]
        %v683 = vld [vmem:[%s676 + $0x30] sm:$0xff]
        %v684 = vmul.f32 %v344, %v417
        %v685 = vmul.f32 %v345, %v418
        %v686 = vmul.f32 %v346, %v419
        %v687 = vmul.f32 %v347, %v420
        %v688 = vmul.f32 %v348, %v421
        %v689 = vmul.f32 %v349, %v422
        %v690 = vmul.f32 %v350, %v423
        %v691 = vmul.f32 %v351, %v424
        %v692 = vmul.f32 %v352, %v425
        %v693 = vmul.f32 %v353, %v426
        %v694 = vmul.f32 %v354, %v427
        %v695 = vmul.f32 %v355, %v428
        %v696 = vmul.f32 %v356, %v429
        %v697 = vmul.f32 %v357, %v430
        %v698 = vmul.f32 %v358, %v431
        %v699 = vmul.f32 %v359, %v432
        %v700 = vmul.f32 %v360, %v433
        %v701 = vmul.f32 %v361, %v434
        %v702 = vmul.f32 %v362, %v435
        %v703 = vmul.f32 %v363, %v436
        %v704 = vmul.f32 %v364, %v437
        %v705 = vmul.f32 %v365, %v438
        %v706 = vmul.f32 %v366, %v439
        %v707 = vmul.f32 %v367, %v440
        %v708 = vmul.f32 %v368, %v441
        %v709 = vmul.f32 %v369, %v442
        %v710 = vmul.f32 %v370, %v443
        %v711 = vmul.f32 %v371, %v444
        %v712 = vadd.f32 %v684, %v691
        %v713 = vadd.f32 %v712, %v698
        %v714 = vadd.f32 %v713, %v705
        %v715 = vadd.f32 %v685, %v692
        %v716 = vadd.f32 %v715, %v699
        %v717 = vadd.f32 %v716, %v706
        %v718 = vadd.f32 %v686, %v693
        %v719 = vadd.f32 %v718, %v700
        %v720 = vadd.f32 %v719, %v707
        %v721 = vadd.f32 %v687, %v694
        %v722 = vadd.f32 %v721, %v701
        %v723 = vadd.f32 %v722, %v708
        %v724 = vadd.f32 %v688, %v695
        %v725 = vadd.f32 %v724, %v702
        %v726 = vadd.f32 %v725, %v709
        %v727 = vadd.f32 %v689, %v696
        %v728 = vadd.f32 %v727, %v703
        %v729 = vadd.f32 %v728, %v710
        %v730 = vadd.f32 %v690, %v697
        %v731 = vadd.f32 %v730, %v704
        %v732 = vadd.f32 %v731, %v711
        %v733 = vadd.f32 %v677, %v714
        %v734 = vadd.f32 %v678, %v717
        %v735 = vadd.f32 %v679, %v720
        %v736 = vadd.f32 %v680, %v723
        %v737 = vadd.f32 %v681, %v726
        %v738 = vadd.f32 %v682, %v729
        %v739 = vadd.f32 %v683, %v732
        %740 = vst [vmem:[%s676] sm:$0xff] %v733
        %741 = vst [vmem:[%s676 + $0x8] sm:$0xff] %v734
        %742 = vst [vmem:[%s676 + $0x10] sm:$0xff] %v735
        %743 = vst [vmem:[%s676 + $0x18] sm:$0xff] %v736
        %744 = vst [vmem:[%s676 + $0x20] sm:$0xff] %v737
        %745 = vst [vmem:[%s676 + $0x28] sm:$0xff] %v738
        %746 = vst [vmem:[%s676 + $0x30] sm:$0xff] %v739
      $region40: #{single_ccc_loss.1} parent=31 // pred_fallthru
        _
      %p747 = scmp.lt.s32.totalorder %s299, 32
      // Predicated region
      $region41: #{single_ccc_loss.1} parent=31 // pred_check
        %p748 = pneg %p747
      $region42: #{single_ccc_loss.1} parent=31 // pred_check_branch
        %750 = sbr.rel (%p748) target = $region44
      $region43: #{single_ccc_loss.1} parent=31 // pred_region
        %v751 = vlaneseq
        %v752 = vshrl.u32 %v751, 7
        %v753 = vadd.s32 %v752, 8
        %v754 = vadd.s32 %v752, 16
        %v755 = vadd.s32 %v752, 24
        %v756 = vstv %s299
        %vm757 = vcmp.lt.s32.totalorder %v752, %v756
        %vm758 = vcmp.lt.s32.totalorder %v753, %v756
        %vm759 = vcmp.lt.s32.totalorder %v754, %v756
        %vm760 = vcmp.lt.s32.totalorder %v755, %v756
        %v761 = vsel %vm757, %v344, 0.0
        %v762 = vsel %vm757, %v345, 0.0
        %v763 = vsel %vm757, %v346, 0.0
        %v764 = vsel %vm757, %v347, 0.0
        %v765 = vsel %vm757, %v348, 0.0
        %v766 = vsel %vm757, %v349, 0.0
        %v767 = vsel %vm757, %v350, 0.0
        %v768 = vsel %vm758, %v351, 0.0
        %v769 = vsel %vm758, %v352, 0.0
        %v770 = vsel %vm758, %v353, 0.0
        %v771 = vsel %vm758, %v354, 0.0
        %v772 = vsel %vm758, %v355, 0.0
        %v773 = vsel %vm758, %v356, 0.0
        %v774 = vsel %vm758, %v357, 0.0
        %v775 = vsel %vm759, %v358, 0.0
        %v776 = vsel %vm759, %v359, 0.0
        %v777 = vsel %vm759, %v360, 0.0
        %v778 = vsel %vm759, %v361, 0.0
        %v779 = vsel %vm759, %v362, 0.0
        %v780 = vsel %vm759, %v363, 0.0
        %v781 = vsel %vm759, %v364, 0.0
        %v782 = vsel %vm760, %v365, 0.0
        %v783 = vsel %vm760, %v366, 0.0
        %v784 = vsel %vm760, %v367, 0.0
        %v785 = vsel %vm760, %v368, 0.0
        %v786 = vsel %vm760, %v369, 0.0
        %v787 = vsel %vm760, %v370, 0.0
        %v788 = vsel %vm760, %v371, 0.0
        %v789 = vsel %vm757, %v417, 0.0
        %v790 = vsel %vm757, %v418, 0.0
        %v791 = vsel %vm757, %v419, 0.0
        %v792 = vsel %vm757, %v420, 0.0
        %v793 = vsel %vm757, %v421, 0.0
        %v794 = vsel %vm757, %v422, 0.0
        %v795 = vsel %vm757, %v423, 0.0
        %v796 = vsel %vm758, %v424, 0.0
        %v797 = vsel %vm758, %v425, 0.0
        %v798 = vsel %vm758, %v426, 0.0
        %v799 = vsel %vm758, %v427, 0.0
        %v800 = vsel %vm758, %v428, 0.0
        %v801 = vsel %vm758, %v429, 0.0
        %v802 = vsel %vm758, %v430, 0.0
        %v803 = vsel %vm759, %v431, 0.0
        %v804 = vsel %vm759, %v432, 0.0
        %v805 = vsel %vm759, %v433, 0.0
        %v806 = vsel %vm759, %v434, 0.0
        %v807 = vsel %vm759, %v435, 0.0
        %v808 = vsel %vm759, %v436, 0.0
        %v809 = vsel %vm759, %v437, 0.0
        %v810 = vsel %vm760, %v438, 0.0
        %v811 = vsel %vm760, %v439, 0.0
        %v812 = vsel %vm760, %v440, 0.0
        %v813 = vsel %vm760, %v441, 0.0
        %v814 = vsel %vm760, %v442, 0.0
        %v815 = vsel %vm760, %v443, 0.0
        %v816 = vsel %vm760, %v444, 0.0
        %v817 = vld [vmem:[%s256] sm:$0xff]
        %v818 = vld [vmem:[%s256 + $0x8] sm:$0xff]
        %v819 = vld [vmem:[%s256 + $0x10] sm:$0xff]
        %v820 = vld [vmem:[%s256 + $0x18] sm:$0xff]
        %v821 = vld [vmem:[%s256 + $0x20] sm:$0xff]
        %v822 = vld [vmem:[%s256 + $0x28] sm:$0xff]
        %v823 = vld [vmem:[%s256 + $0x30] sm:$0xff]
        %v824 = vadd.f32 %v761, %v768
        %v825 = vadd.f32 %v824, %v775
        %v826 = vadd.f32 %v825, %v782
        %v827 = vadd.f32 %v762, %v769
        %v828 = vadd.f32 %v827, %v776
        %v829 = vadd.f32 %v828, %v783
        %v830 = vadd.f32 %v763, %v770
        %v831 = vadd.f32 %v830, %v777
        %v832 = vadd.f32 %v831, %v784
        %v833 = vadd.f32 %v764, %v771
        %v834 = vadd.f32 %v833, %v778
        %v835 = vadd.f32 %v834, %v785
        %v836 = vadd.f32 %v765, %v772
        %v837 = vadd.f32 %v836, %v779
        %v838 = vadd.f32 %v837, %v786
        %v839 = vadd.f32 %v766, %v773
        %v840 = vadd.f32 %v839, %v780
        %v841 = vadd.f32 %v840, %v787
        %v842 = vadd.f32 %v767, %v774
        %v843 = vadd.f32 %v842, %v781
        %v844 = vadd.f32 %v843, %v788
        %v845 = vadd.f32 %v817, %v826
        %v846 = vadd.f32 %v818, %v829
        %v847 = vadd.f32 %v819, %v832
        %v848 = vadd.f32 %v820, %v835
        %v849 = vadd.f32 %v821, %v838
        %v850 = vadd.f32 %v822, %v841
        %v851 = vadd.f32 %v823, %v844
        %852 = vst [vmem:[%s256] sm:$0xff] %v845
        %853 = vst [vmem:[%s256 + $0x8] sm:$0xff] %v846
        %854 = vst [vmem:[%s256 + $0x10] sm:$0xff] %v847
        %855 = vst [vmem:[%s256 + $0x18] sm:$0xff] %v848
        %856 = vst [vmem:[%s256 + $0x20] sm:$0xff] %v849
        %857 = vst [vmem:[%s256 + $0x28] sm:$0xff] %v850
        %858 = vst [vmem:[%s256 + $0x30] sm:$0xff] %v851
        %s859 = scalar_lea.vmem %s256, 56
        %v860 = vld [vmem:[%s859] sm:$0xff]
        %v861 = vld [vmem:[%s859 + $0x8] sm:$0xff]
        %v862 = vld [vmem:[%s859 + $0x10] sm:$0xff]
        %v863 = vld [vmem:[%s859 + $0x18] sm:$0xff]
        %v864 = vld [vmem:[%s859 + $0x20] sm:$0xff]
        %v865 = vld [vmem:[%s859 + $0x28] sm:$0xff]
        %v866 = vld [vmem:[%s859 + $0x30] sm:$0xff]
        %v867 = vadd.f32 %v789, %v796
        %v868 = vadd.f32 %v867, %v803
        %v869 = vadd.f32 %v868, %v810
        %v870 = vadd.f32 %v790, %v797
        %v871 = vadd.f32 %v870, %v804
        %v872 = vadd.f32 %v871, %v811
        %v873 = vadd.f32 %v791, %v798
        %v874 = vadd.f32 %v873, %v805
        %v875 = vadd.f32 %v874, %v812
        %v876 = vadd.f32 %v792, %v799
        %v877 = vadd.f32 %v876, %v806
        %v878 = vadd.f32 %v877, %v813
        %v879 = vadd.f32 %v793, %v800
        %v880 = vadd.f32 %v879, %v807
        %v881 = vadd.f32 %v880, %v814
        %v882 = vadd.f32 %v794, %v801
        %v883 = vadd.f32 %v882, %v808
        %v884 = vadd.f32 %v883, %v815
        %v885 = vadd.f32 %v795, %v802
        %v886 = vadd.f32 %v885, %v809
        %v887 = vadd.f32 %v886, %v816
        %v888 = vadd.f32 %v860, %v869
        %v889 = vadd.f32 %v861, %v872
        %v890 = vadd.f32 %v862, %v875
        %v891 = vadd.f32 %v863, %v878
        %v892 = vadd.f32 %v864, %v881
        %v893 = vadd.f32 %v865, %v884
        %v894 = vadd.f32 %v866, %v887
        %895 = vst [vmem:[%s859] sm:$0xff] %v888
        %896 = vst [vmem:[%s859 + $0x8] sm:$0xff] %v889
        %897 = vst [vmem:[%s859 + $0x10] sm:$0xff] %v890
        %898 = vst [vmem:[%s859 + $0x18] sm:$0xff] %v891
        %899 = vst [vmem:[%s859 + $0x20] sm:$0xff] %v892
        %900 = vst [vmem:[%s859 + $0x28] sm:$0xff] %v893
        %901 = vst [vmem:[%s859 + $0x30] sm:$0xff] %v894
        %s902 = scalar_lea.vmem %s256, 112
        %v903 = vld [vmem:[%s902] sm:$0xff]
        %v904 = vld [vmem:[%s902 + $0x8] sm:$0xff]
        %v905 = vld [vmem:[%s902 + $0x10] sm:$0xff]
        %v906 = vld [vmem:[%s902 + $0x18] sm:$0xff]
        %v907 = vld [vmem:[%s902 + $0x20] sm:$0xff]
        %v908 = vld [vmem:[%s902 + $0x28] sm:$0xff]
        %v909 = vld [vmem:[%s902 + $0x30] sm:$0xff]
        %v910 = vmul.f32 %v761, %v761
        %v911 = vmul.f32 %v762, %v762
        %v912 = vmul.f32 %v763, %v763
        %v913 = vmul.f32 %v764, %v764
        %v914 = vmul.f32 %v765, %v765
        %v915 = vmul.f32 %v766, %v766
        %v916 = vmul.f32 %v767, %v767
        %v917 = vmul.f32 %v768, %v768
        %v918 = vmul.f32 %v769, %v769
        %v919 = vmul.f32 %v770, %v770
        %v920 = vmul.f32 %v771, %v771
        %v921 = vmul.f32 %v772, %v772
        %v922 = vmul.f32 %v773, %v773
        %v923 = vmul.f32 %v774, %v774
        %v924 = vmul.f32 %v775, %v775
        %v925 = vmul.f32 %v776, %v776
        %v926 = vmul.f32 %v777, %v777
        %v927 = vmul.f32 %v778, %v778
        %v928 = vmul.f32 %v779, %v779
        %v929 = vmul.f32 %v780, %v780
        %v930 = vmul.f32 %v781, %v781
        %v931 = vmul.f32 %v782, %v782
        %v932 = vmul.f32 %v783, %v783
        %v933 = vmul.f32 %v784, %v784
        %v934 = vmul.f32 %v785, %v785
        %v935 = vmul.f32 %v786, %v786
        %v936 = vmul.f32 %v787, %v787
        %v937 = vmul.f32 %v788, %v788
        %v938 = vadd.f32 %v910, %v917
        %v939 = vadd.f32 %v938, %v924
        %v940 = vadd.f32 %v939, %v931
        %v941 = vadd.f32 %v911, %v918
        %v942 = vadd.f32 %v941, %v925
        %v943 = vadd.f32 %v942, %v932
        %v944 = vadd.f32 %v912, %v919
        %v945 = vadd.f32 %v944, %v926
        %v946 = vadd.f32 %v945, %v933
        %v947 = vadd.f32 %v913, %v920
        %v948 = vadd.f32 %v947, %v927
        %v949 = vadd.f32 %v948, %v934
        %v950 = vadd.f32 %v914, %v921
        %v951 = vadd.f32 %v950, %v928
        %v952 = vadd.f32 %v951, %v935
        %v953 = vadd.f32 %v915, %v922
        %v954 = vadd.f32 %v953, %v929
        %v955 = vadd.f32 %v954, %v936
        %v956 = vadd.f32 %v916, %v923
        %v957 = vadd.f32 %v956, %v930
        %v958 = vadd.f32 %v957, %v937
        %v959 = vadd.f32 %v903, %v940
        %v960 = vadd.f32 %v904, %v943
        %v961 = vadd.f32 %v905, %v946
        %v962 = vadd.f32 %v906, %v949
        %v963 = vadd.f32 %v907, %v952
        %v964 = vadd.f32 %v908, %v955
        %v965 = vadd.f32 %v909, %v958
        %966 = vst [vmem:[%s902] sm:$0xff] %v959
        %967 = vst [vmem:[%s902 + $0x8] sm:$0xff] %v960
        %968 = vst [vmem:[%s902 + $0x10] sm:$0xff] %v961
        %969 = vst [vmem:[%s902 + $0x18] sm:$0xff] %v962
        %970 = vst [vmem:[%s902 + $0x20] sm:$0xff] %v963
        %971 = vst [vmem:[%s902 + $0x28] sm:$0xff] %v964
        %972 = vst [vmem:[%s902 + $0x30] sm:$0xff] %v965
        %s973 = scalar_lea.vmem %s256, 168
        %v974 = vld [vmem:[%s973] sm:$0xff]
        %v975 = vld [vmem:[%s973 + $0x8] sm:$0xff]
        %v976 = vld [vmem:[%s973 + $0x10] sm:$0xff]
        %v977 = vld [vmem:[%s973 + $0x18] sm:$0xff]
        %v978 = vld [vmem:[%s973 + $0x20] sm:$0xff]
        %v979 = vld [vmem:[%s973 + $0x28] sm:$0xff]
        %v980 = vld [vmem:[%s973 + $0x30] sm:$0xff]
        %v981 = vmul.f32 %v789, %v789
        %v982 = vmul.f32 %v790, %v790
        %v983 = vmul.f32 %v791, %v791
        %v984 = vmul.f32 %v792, %v792
        %v985 = vmul.f32 %v793, %v793
        %v986 = vmul.f32 %v794, %v794
        %v987 = vmul.f32 %v795, %v795
        %v988 = vmul.f32 %v796, %v796
        %v989 = vmul.f32 %v797, %v797
        %v990 = vmul.f32 %v798, %v798
        %v991 = vmul.f32 %v799, %v799
        %v992 = vmul.f32 %v800, %v800
        %v993 = vmul.f32 %v801, %v801
        %v994 = vmul.f32 %v802, %v802
        %v995 = vmul.f32 %v803, %v803
        %v996 = vmul.f32 %v804, %v804
        %v997 = vmul.f32 %v805, %v805
        %v998 = vmul.f32 %v806, %v806
        %v999 = vmul.f32 %v807, %v807
        %v1000 = vmul.f32 %v808, %v808
        %v1001 = vmul.f32 %v809, %v809
        %v1002 = vmul.f32 %v810, %v810
        %v1003 = vmul.f32 %v811, %v811
        %v1004 = vmul.f32 %v812, %v812
        %v1005 = vmul.f32 %v813, %v813
        %v1006 = vmul.f32 %v814, %v814
        %v1007 = vmul.f32 %v815, %v815
        %v1008 = vmul.f32 %v816, %v816
        %v1009 = vadd.f32 %v981, %v988
        %v1010 = vadd.f32 %v1009, %v995
        %v1011 = vadd.f32 %v1010, %v1002
        %v1012 = vadd.f32 %v982, %v989
        %v1013 = vadd.f32 %v1012, %v996
        %v1014 = vadd.f32 %v1013, %v1003
        %v1015 = vadd.f32 %v983, %v990
        %v1016 = vadd.f32 %v1015, %v997
        %v1017 = vadd.f32 %v1016, %v1004
        %v1018 = vadd.f32 %v984, %v991
        %v1019 = vadd.f32 %v1018, %v998
        %v1020 = vadd.f32 %v1019, %v1005
        %v1021 = vadd.f32 %v985, %v992
        %v1022 = vadd.f32 %v1021, %v999
        %v1023 = vadd.f32 %v1022, %v1006
        %v1024 = vadd.f32 %v986, %v993
        %v1025 = vadd.f32 %v1024, %v1000
        %v1026 = vadd.f32 %v1025, %v1007
        %v1027 = vadd.f32 %v987, %v994
        %v1028 = vadd.f32 %v1027, %v1001
        %v1029 = vadd.f32 %v1028, %v1008
        %v1030 = vadd.f32 %v974, %v1011
        %v1031 = vadd.f32 %v975, %v1014
        %v1032 = vadd.f32 %v976, %v1017
        %v1033 = vadd.f32 %v977, %v1020
        %v1034 = vadd.f32 %v978, %v1023
        %v1035 = vadd.f32 %v979, %v1026
        %v1036 = vadd.f32 %v980, %v1029
        %1037 = vst [vmem:[%s973] sm:$0xff] %v1030
        %1038 = vst [vmem:[%s973 + $0x8] sm:$0xff] %v1031
        %1039 = vst [vmem:[%s973 + $0x10] sm:$0xff] %v1032
        %1040 = vst [vmem:[%s973 + $0x18] sm:$0xff] %v1033
        %1041 = vst [vmem:[%s973 + $0x20] sm:$0xff] %v1034
        %1042 = vst [vmem:[%s973 + $0x28] sm:$0xff] %v1035
        %1043 = vst [vmem:[%s973 + $0x30] sm:$0xff] %v1036
        %s1044 = scalar_lea.vmem %s256, 224
        %v1045 = vld [vmem:[%s1044] sm:$0xff]
        %v1046 = vld [vmem:[%s1044 + $0x8] sm:$0xff]
        %v1047 = vld [vmem:[%s1044 + $0x10] sm:$0xff]
        %v1048 = vld [vmem:[%s1044 + $0x18] sm:$0xff]
        %v1049 = vld [vmem:[%s1044 + $0x20] sm:$0xff]
        %v1050 = vld [vmem:[%s1044 + $0x28] sm:$0xff]
        %v1051 = vld [vmem:[%s1044 + $0x30] sm:$0xff]
        %v1052 = vmul.f32 %v761, %v789
        %v1053 = vmul.f32 %v762, %v790
        %v1054 = vmul.f32 %v763, %v791
        %v1055 = vmul.f32 %v764, %v792
        %v1056 = vmul.f32 %v765, %v793
        %v1057 = vmul.f32 %v766, %v794
        %v1058 = vmul.f32 %v767, %v795
        %v1059 = vmul.f32 %v768, %v796
        %v1060 = vmul.f32 %v769, %v797
        %v1061 = vmul.f32 %v770, %v798
        %v1062 = vmul.f32 %v771, %v799
        %v1063 = vmul.f32 %v772, %v800
        %v1064 = vmul.f32 %v773, %v801
        %v1065 = vmul.f32 %v774, %v802
        %v1066 = vmul.f32 %v775, %v803
        %v1067 = vmul.f32 %v776, %v804
        %v1068 = vmul.f32 %v777, %v805
        %v1069 = vmul.f32 %v778, %v806
        %v1070 = vmul.f32 %v779, %v807
        %v1071 = vmul.f32 %v780, %v808
        %v1072 = vmul.f32 %v781, %v809
        %v1073 = vmul.f32 %v782, %v810
        %v1074 = vmul.f32 %v783, %v811
        %v1075 = vmul.f32 %v784, %v812
        %v1076 = vmul.f32 %v785, %v813
        %v1077 = vmul.f32 %v786, %v814
        %v1078 = vmul.f32 %v787, %v815
        %v1079 = vmul.f32 %v788, %v816
        %v1080 = vadd.f32 %v1052, %v1059
        %v1081 = vadd.f32 %v1080, %v1066
        %v1082 = vadd.f32 %v1081, %v1073
        %v1083 = vadd.f32 %v1053, %v1060
        %v1084 = vadd.f32 %v1083, %v1067
        %v1085 = vadd.f32 %v1084, %v1074
        %v1086 = vadd.f32 %v1054, %v1061
        %v1087 = vadd.f32 %v1086, %v1068
        %v1088 = vadd.f32 %v1087, %v1075
        %v1089 = vadd.f32 %v1055, %v1062
        %v1090 = vadd.f32 %v1089, %v1069
        %v1091 = vadd.f32 %v1090, %v1076
        %v1092 = vadd.f32 %v1056, %v1063
        %v1093 = vadd.f32 %v1092, %v1070
        %v1094 = vadd.f32 %v1093, %v1077
        %v1095 = vadd.f32 %v1057, %v1064
        %v1096 = vadd.f32 %v1095, %v1071
        %v1097 = vadd.f32 %v1096, %v1078
        %v1098 = vadd.f32 %v1058, %v1065
        %v1099 = vadd.f32 %v1098, %v1072
        %v1100 = vadd.f32 %v1099, %v1079
        %v1101 = vadd.f32 %v1045, %v1082
        %v1102 = vadd.f32 %v1046, %v1085
        %v1103 = vadd.f32 %v1047, %v1088
        %v1104 = vadd.f32 %v1048, %v1091
        %v1105 = vadd.f32 %v1049, %v1094
        %v1106 = vadd.f32 %v1050, %v1097
        %v1107 = vadd.f32 %v1051, %v1100
        %1108 = vst [vmem:[%s1044] sm:$0xff] %v1101
        %1109 = vst [vmem:[%s1044 + $0x8] sm:$0xff] %v1102
        %1110 = vst [vmem:[%s1044 + $0x10] sm:$0xff] %v1103
        %1111 = vst [vmem:[%s1044 + $0x18] sm:$0xff] %v1104
        %1112 = vst [vmem:[%s1044 + $0x20] sm:$0xff] %v1105
        %1113 = vst [vmem:[%s1044 + $0x28] sm:$0xff] %v1106
        %1114 = vst [vmem:[%s1044 + $0x30] sm:$0xff] %v1107
      $region44: #{single_ccc_loss.1} parent=31 // pred_fallthru
        _
      %s1115 = smul.u32 5, %s18
      %p1116 = scmp.lt.s32.totalorder %s1115, 9
      %s1117 = scalar_select %p1116, %s1115, 9
      %s1118 = smul.addr %s1117, 7
      %s1119 = smul.addr %s1118, 8
      %s1120 = scalar_lea.vmem %s3, %s1119
      // Predicated region
      $region45: #{single_ccc_loss.1} parent=31 // pred_check
        %p1121 = pneg %p129
      $region46: #{single_ccc_loss.1} parent=31 // pred_check_branch
        %1123 = sbr.rel (%p1121) target = $region48
      $region47: #{single_ccc_loss.1} parent=31 // pred_region
        %s1124 = smul.u32 5, %s18
      $region48: #{single_ccc_loss.1} parent=31 // pred_fallthru
        _
    $region32: #{single_ccc_loss.1} parent=5 // pred_fallthru
      _
    %p1125 = scmp.le.s32.totalorder 2, %s9
    // Predicated region
    $region49: #{single_ccc_loss.1} parent=5 // pred_check
      %p1126 = pneg %p1125
    $region50: #{single_ccc_loss.1} parent=5 // pred_check_branch
      %1128 = sbr.rel (%p1126) target = $region52
    $region51: #{single_ccc_loss.1} parent=5 // pred_region
      %s1129 = ssub.s32 %s9, 2
      // Predicated region
      $region53: #{single_ccc_loss.1} parent=51 // pred_check
        %p1130 = pneg %p135
      $region54: #{single_ccc_loss.1} parent=51 // pred_check_branch
        %1132 = sbr.rel (%p1130) target = $region56
      $region55: #{single_ccc_loss.1} parent=51 // pred_region
        %s1133 = smul.u32 5, %s20
        %p1134 = scmp.lt.s32.totalorder %s1133, 9
        %s1135 = scalar_select %p1134, %s1133, 9
        %s1136 = smul.addr %s1135, 7
        %s1137 = smul.addr %s1136, 8
        %s1138 = scalar_lea.vmem %s3, %s1137
      $region56: #{single_ccc_loss.1} parent=51 // pred_fallthru
        _
    $region52: #{single_ccc_loss.1} parent=5 // pred_fallthru
      _
  $region6: #{single_ccc_loss.1} parent=0 // loop_footer
    %s13 = sadd.s32 1, %s9
  $region7: #{single_ccc_loss.1} parent=0 // loop_footer_branch
    %8 = sbr.rel target = $region3
  $region8: #{single_ccc_loss.1} parent=0 // loop_exit
    _

</llo_original>
